<compile_context>
chip_gen: v6e
topology: v6e:2x2x1
jax: 0.10.0
libtpu: 0.0.40
codegen_flags: <defaults>
</compile_context>

<pallas_src>
import jax
import jax.numpy as jnp
from jax import lax
from jax.experimental import pallas as pl
from jax.experimental.pallas import tpu as pltpu


def _make_vae_kernel(latent_dim, inv_keep):
    """Kernel factory closing over static constants."""
    L = latent_dim
    inv_keep = float(inv_keep)

    def kernel(x_ref, w1_ref, b1_ref, w2_ref, b2_ref, w3m_ref, w3e_ref, b3_ref,
               w4_ref, b4_ref, eps_ref, m1_ref, m2_ref, out_ref):
        x = x_ref[...]

        # ---- encode ----
        h1 = jnp.dot(x, w1_ref[...], preferred_element_type=jnp.float32) + b1_ref[...]
        h1 = jnp.maximum(h1, 0.0)                                   # relu
        h1 = h1 * (m1_ref[...].astype(jnp.float32) * inv_keep)      # dropout(p), int8 mask

        # fused, lane-placed head: lanes [0,L)=logvar, [L,2L)=mean, rest 0
        ml = jnp.dot(h1, w2_ref[...], preferred_element_type=jnp.float32) + b2_ref[...]

        # ---- reparameterize + decode (distributed matmul, no lane shuffles) ----
        # z = mean + eps * exp(0.5*logvar);  z @ w3 == ml @ w3_mean + (eps*std) @ w3
        std = jnp.exp(0.5 * ml[:, :L])                               # aligned slice
        es = eps_ref[...] * std
        h3 = (jnp.dot(ml, w3m_ref[...], preferred_element_type=jnp.float32)
              + jnp.dot(es, w3e_ref[...], preferred_element_type=jnp.float32)
              + b3_ref[...])
        h3 = jnp.maximum(h3, 0.0)                                    # relu
        h3 = h3 * (m2_ref[...].astype(jnp.float32) * inv_keep)       # dropout(p)

        # lane-placed fc4: real logits already live at output lanes [2L, 2L+D)
        logits = jnp.dot(h3, w4_ref[...], preferred_element_type=jnp.float32) + b4_ref[...]
        recon = 0.5 * (jnp.tanh(0.5 * logits) + 1.0)                 # sigmoid via one EUP tanh

        # epilogue: one lane select, no concatenate / zeros materialization
        lane = lax.broadcasted_iota(jnp.int32, recon.shape, 1)
        out_ref[...] = jnp.where(lane < 2 * L, ml, recon)

    return kernel


def vae_forward(params, x, eps, mask1, mask2, *, p_drop=0.2, tile_b=None):
    """VAE forward as one batched Pallas call.

    mask1/mask2 are int8 keep-masks (1 = keep); the 1/(1-p) scale is applied
    in-kernel.  Returns (recon, z_mean, z_log_var)."""
    B, D = x.shape
    H = params["w1"].shape[1]
    L = params["w21"].shape[1]
    f32 = jnp.float32

    # Packed output width: logvar(L) | mean(L) | recon(D), padded to 128 lanes.
    pack_w = max(128, pl.cdiv(2 * L + D, 128) * 128)

    # ---- lane-placed fused parameter layout (zero-padding is free: the VMEM
    #      blocks are lane-padded to 128 anyway) ----
    w2f = jnp.zeros((H, pack_w), f32)
    w2f = w2f.at[:, :L].set(params["w22"]).at[:, L:2 * L].set(params["w21"])
    b2f = jnp.zeros((1, pack_w), f32)
    b2f = b2f.at[:, :L].set(params["b22"]).at[:, L:2 * L].set(params["b21"])

    w3m = jnp.zeros((pack_w, H), f32).at[L:2 * L, :].set(params["w3"])   # mean branch
    w3e = params["w3"]                                                   # eps*std branch
    b3 = params["b3"]

    w4p = jnp.zeros((H, pack_w), f32).at[:, 2 * L:2 * L + D].set(params["w4"])
    b4p = jnp.zeros((1, pack_w), f32).at[:, 2 * L:2 * L + D].set(params["b4"])

    if tile_b is None:
        # >= ~4 grid steps (2 pipelined per TensorCore on v7x), capped so
        # per-step VMEM stays far under the 16 MiB v5e scoped default.
        tile_b = int(max(128, min(1024, pl.cdiv(B, 4 * 128) * 128)))

    b_pad = pl.cdiv(B, tile_b) * tile_b
    if b_pad != B:
        pad = ((0, b_pad - B), (0, 0))
        x = jnp.pad(x, pad)
        eps = jnp.pad(eps, pad)
        mask1 = jnp.pad(mask1, pad)
        mask2 = jnp.pad(mask2, pad)

    grid = (b_pad // tile_b,)

    def resident(shape):          # weights/biases: same block every grid step
        return pl.BlockSpec(shape, lambda i: (0, 0))

    def tiled(width, dtype_bytes=4):   # per-batch-tile operands
        del dtype_bytes
        return pl.BlockSpec((tile_b, width), lambda i: (i, 0))

    cost = pl.CostEstimate(
        flops=2 * b_pad * (D * H + H * pack_w + pack_w * H + L * H + H * pack_w),
        transcendentals=b_pad * (L + pack_w),        # exp(0.5*logvar) + tanh(sigmoid)
        bytes_accessed=(4 * b_pad * (D + L + pack_w)             # x, eps, packed out (f32)
                        + 2 * b_pad * H                          # two int8 masks
                        + 4 * (D * H + H + 2 * H * pack_w + 2 * pack_w
                               + pack_w * H + L * H + H)),       # resident params
    )

    out = pl.pallas_call(
        _make_vae_kernel(L, 1.0 / (1.0 - p_drop)),
        out_shape=jax.ShapeDtypeStruct((b_pad, pack_w), f32),
        grid_spec=pltpu.PrefetchScalarGridSpec(
            num_scalar_prefetch=0,
            grid=grid,
            in_specs=[
                tiled(D),                                        # x
                resident((D, H)), resident((1, H)),              # fc1
                resident((H, pack_w)), resident((1, pack_w)),    # fused fc22|fc21 head
                resident((pack_w, H)),                           # w3 at rows [L,2L)
                resident((L, H)), resident((1, H)),              # w3 (eps branch), b3
                resident((H, pack_w)), resident((1, pack_w)),    # fc4 lane-placed
                tiled(L),                                        # eps
                tiled(H),                                        # dropout mask 1 (int8)
                tiled(H),                                        # dropout mask 2 (int8)
            ],
            out_specs=pl.BlockSpec((tile_b, pack_w), lambda i: (i, 0)),
        ),
        compiler_params=pltpu.CompilerParams(
            dimension_semantics=("parallel",)),                  # shard batch on 2 TCs (v7x)
        cost_estimate=cost,
    )(x, params["w1"], params["b1"], w2f, b2f, w3m, w3e, b3, w4p, b4p,
      eps, mask1, mask2)

    z_logvar = out[:B, :L]
    z_mean = out[:B, L:2 * L]
    recon = out[:B, 2 * L:2 * L + D]
    return recon, z_mean, z_logvar


def _vae_reference(params, x, eps, mask1, mask2, p_drop=0.2):
    """Pure-JAX reference mirroring the PyTorch forward (int8 keep-masks)."""
    inv_keep = 1.0 / (1.0 - p_drop)
    m1 = mask1.astype(jnp.float32) * inv_keep
    m2 = mask2.astype(jnp.float32) * inv_keep
    h1 = jnp.maximum(x @ params["w1"] + params["b1"], 0.0) * m1
    z_mean = h1 @ params["w21"] + params["b21"]
    z_logvar = h1 @ params["w22"] + params["b22"]
    z = z_mean + eps * jnp.exp(0.5 * z_logvar)
    h3 = jnp.maximum(z @ params["w3"] + params["b3"], 0.0) * m2
    recon = jax.nn.sigmoid(h3 @ params["w4"] + params["b4"])
    return recon, z_mean, z_logvar


def _init_linear(key, fan_in, fan_out):
    """Matches torch.nn.Linear's U(-1/sqrt(fan_in), 1/sqrt(fan_in)) init."""
    kw, kb = jax.random.split(key)
    bound = 1.0 / float(fan_in) ** 0.5
    w = jax.random.uniform(kw, (fan_in, fan_out), jnp.float32, -bound, bound)
    b = jax.random.uniform(kb, (1, fan_out), jnp.float32, -bound, bound)
    return w, b


if __name__ == "__main__":
    key = jax.random.PRNGKey(0)

    # Shapes consistent with the module: input_dim from X_train, latent_dim=20.
    B, INPUT_DIM, HIDDEN, LATENT = 512, 32, 128, 20
    P_DROP = 0.2
    TRAINING = True       # fresh PyTorch module has training=True -> dropout active
    TILE_B = 128          # B=512 -> grid of 4 -> 2 pipelined steps per TC on v7x

    keys = jax.random.split(key, 9)
    w1, b1 = _init_linear(keys[0], INPUT_DIM, HIDDEN)
    w21, b21 = _init_linear(keys[1], HIDDEN, LATENT)
    w22, b22 = _init_linear(keys[2], HIDDEN, LATENT)
    w3, b3 = _init_linear(keys[3], LATENT, HIDDEN)
    w4, b4 = _init_linear(keys[4], HIDDEN, INPUT_DIM)
    params = dict(w1=w1, b1=b1, w21=w21, b21=b21, w22=w22, b22=b22,
                  w3=w3, b3=b3, w4=w4, b4=b4)

    x = jax.random.normal(keys[5], (B, INPUT_DIM), jnp.float32)
    eps = jax.random.normal(keys[6], (B, LATENT), jnp.float32)   # torch.randn_like(std)

    if TRAINING:
        keep = 1.0 - P_DROP
        mask1 = jax.random.bernoulli(keys[7], keep, (B, HIDDEN)).astype(jnp.int8)
        mask2 = jax.random.bernoulli(keys[8], keep, (B, HIDDEN)).astype(jnp.int8)
    else:
        mask1 = jnp.ones((B, HIDDEN), jnp.int8)
        mask2 = jnp.ones((B, HIDDEN), jnp.int8)

    recon, z_mean, z_logvar = vae_forward(params, x, eps, mask1, mask2,
                                          p_drop=P_DROP, tile_b=TILE_B)
    jax.block_until_ready((recon, z_mean, z_logvar))

    # correctness check against the pure-JAX reference
    r_ref, m_ref, lv_ref = _vae_reference(params, x, eps, mask1, mask2, p_drop=P_DROP)
    assert recon.shape == (B, INPUT_DIM)
    assert z_mean.shape == (B, LATENT) and z_logvar.shape == (B, LATENT)
    # 2e-5: covers the distributed (mean@w3 + eps*std@w3) summation order and
    # the tanh-form sigmoid vs jax.nn.sigmoid for these O(1) logits.
    assert jnp.allclose(z_mean, m_ref, atol=2e-5, rtol=2e-5)
    assert jnp.allclose(z_logvar, lv_ref, atol=2e-5, rtol=2e-5)
    assert jnp.allclose(recon, r_ref, atol=2e-5, rtol=2e-5)

    print("KERNEL_OK")
</pallas_src>

<mosaic_0001>
module attributes {stable_mosaic.version = 11 : i64} {
  func.func @kernel(%arg0: i32, %arg1: memref<128x32xf32, #tpu.memory_space<vmem>>, %arg2: memref<32x128xf32, #tpu.memory_space<vmem>>, %arg3: memref<1x128xf32, #tpu.memory_space<vmem>>, %arg4: memref<128x128xf32, #tpu.memory_space<vmem>>, %arg5: memref<1x128xf32, #tpu.memory_space<vmem>>, %arg6: memref<128x128xf32, #tpu.memory_space<vmem>>, %arg7: memref<20x128xf32, #tpu.memory_space<vmem>>, %arg8: memref<1x128xf32, #tpu.memory_space<vmem>>, %arg9: memref<128x128xf32, #tpu.memory_space<vmem>>, %arg10: memref<1x128xf32, #tpu.memory_space<vmem>>, %arg11: memref<128x20xf32, #tpu.memory_space<vmem>>, %arg12: memref<128x128xi8, #tpu.memory_space<vmem>>, %arg13: memref<128x128xi8, #tpu.memory_space<vmem>>, %arg14: memref<128x128xf32, #tpu.memory_space<vmem>>) attributes {dimension_semantics = [#tpu.dimension_semantics<parallel>], iteration_bounds = array<i64: 4>, scalar_prefetch = 0 : i64, scratch_operands = 0 : i64, tpu.core_type = #tpu.core_type<tc>, window_params = [{transform_indices = @transform_0, window_bounds = array<i64: 128, 32>}, {pipeline_mode = #tpu.pipeline_mode<synchronous>, transform_indices = @transform_1, window_bounds = array<i64: 32, 128>}, {pipeline_mode = #tpu.pipeline_mode<synchronous>, transform_indices = @transform_2, window_bounds = array<i64: 1, 128>}, {pipeline_mode = #tpu.pipeline_mode<synchronous>, transform_indices = @transform_3, window_bounds = array<i64: 128, 128>}, {pipeline_mode = #tpu.pipeline_mode<synchronous>, transform_indices = @transform_4, window_bounds = array<i64: 1, 128>}, {pipeline_mode = #tpu.pipeline_mode<synchronous>, transform_indices = @transform_5, window_bounds = array<i64: 128, 128>}, {pipeline_mode = #tpu.pipeline_mode<synchronous>, transform_indices = @transform_6, window_bounds = array<i64: 20, 128>}, {pipeline_mode = #tpu.pipeline_mode<synchronous>, transform_indices = @transform_7, window_bounds = array<i64: 1, 128>}, {pipeline_mode = #tpu.pipeline_mode<synchronous>, transform_indices = @transform_8, window_bounds = array<i64: 128, 128>}, {pipeline_mode = #tpu.pipeline_mode<synchronous>, transform_indices = @transform_9, window_bounds = array<i64: 1, 128>}, {transform_indices = @transform_10, window_bounds = array<i64: 128, 20>}, {transform_indices = @transform_11, window_bounds = array<i64: 128, 128>}, {transform_indices = @transform_12, window_bounds = array<i64: 128, 128>}, {transform_indices = @transform_13, window_bounds = array<i64: 128, 128>}]} {
    %c0 = arith.constant 0 : index
    %c0_0 = arith.constant 0 : index
    %0 = vector.load %arg1[%c0, %c0_0] : memref<128x32xf32, #tpu.memory_space<vmem>>, vector<128x32xf32>
    %c0_1 = arith.constant 0 : index
    %c0_2 = arith.constant 0 : index
    %1 = vector.load %arg2[%c0_1, %c0_2] : memref<32x128xf32, #tpu.memory_space<vmem>>, vector<32x128xf32>
    %cst = arith.constant dense<0.000000e+00> : vector<128x128xf32>
    %2 = tpu.matmul %0, %1, %cst {dimension_numbers = #tpu.dot_dimension_numbers<[1], [0], [0], [1], [0, 0, 1, 1], [], []>} : vector<128x32xf32>, vector<32x128xf32>, vector<128x128xf32> -> vector<128x128xf32>
    %c0_3 = arith.constant 0 : index
    %c0_4 = arith.constant 0 : index
    %3 = vector.load %arg3[%c0_3, %c0_4] : memref<1x128xf32, #tpu.memory_space<vmem>>, vector<1x128xf32>
    %4 = vector.broadcast %3 : vector<1x128xf32> to vector<128x128xf32>
    %5 = arith.addf %2, %4 : vector<128x128xf32>
    %cst_5 = arith.constant 0.000000e+00 : f32
    %6 = vector.broadcast %cst_5 : f32 to vector<128x128xf32>
    %7 = arith.maximumf %5, %6 : vector<128x128xf32>
    %c0_6 = arith.constant 0 : index
    %c0_7 = arith.constant 0 : index
    %8 = vector.load %arg12[%c0_6, %c0_7] : memref<128x128xi8, #tpu.memory_space<vmem>>, vector<128x128xi8>
    %9 = arith.sitofp %8 : vector<128x128xi8> to vector<128x128xf32>
    %cst_8 = arith.constant 1.250000e+00 : f32
    %10 = vector.broadcast %cst_8 : f32 to vector<128x128xf32>
    %11 = arith.mulf %9, %10 : vector<128x128xf32>
    %12 = arith.mulf %7, %11 : vector<128x128xf32>
    %c0_9 = arith.constant 0 : index
    %c0_10 = arith.constant 0 : index
    %13 = vector.load %arg4[%c0_9, %c0_10] : memref<128x128xf32, #tpu.memory_space<vmem>>, vector<128x128xf32>
    %cst_11 = arith.constant dense<0.000000e+00> : vector<128x128xf32>
    %14 = tpu.matmul %12, %13, %cst_11 {dimension_numbers = #tpu.dot_dimension_numbers<[1], [0], [0], [1], [0, 0, 1, 1], [], []>} : vector<128x128xf32>, vector<128x128xf32>, vector<128x128xf32> -> vector<128x128xf32>
    %c0_12 = arith.constant 0 : index
    %c0_13 = arith.constant 0 : index
    %15 = vector.load %arg5[%c0_12, %c0_13] : memref<1x128xf32, #tpu.memory_space<vmem>>, vector<1x128xf32>
    %16 = vector.broadcast %15 : vector<1x128xf32> to vector<128x128xf32>
    %17 = arith.addf %14, %16 : vector<128x128xf32>
    %18 = vector.extract_strided_slice %17 {offsets = [0, 0], sizes = [128, 20], strides = [1, 1]} : vector<128x128xf32> to vector<128x20xf32>
    %cst_14 = arith.constant 5.000000e-01 : f32
    %19 = vector.broadcast %cst_14 : f32 to vector<128x20xf32>
    %20 = arith.mulf %19, %18 : vector<128x20xf32>
    %21 = math.exp %20 : vector<128x20xf32>
    %c0_15 = arith.constant 0 : index
    %c0_16 = arith.constant 0 : index
    %22 = vector.load %arg11[%c0_15, %c0_16] : memref<128x20xf32, #tpu.memory_space<vmem>>, vector<128x20xf32>
    %23 = arith.mulf %22, %21 : vector<128x20xf32>
    %c0_17 = arith.constant 0 : index
    %c0_18 = arith.constant 0 : index
    %24 = vector.load %arg6[%c0_17, %c0_18] : memref<128x128xf32, #tpu.memory_space<vmem>>, vector<128x128xf32>
    %cst_19 = arith.constant dense<0.000000e+00> : vector<128x128xf32>
    %25 = tpu.matmul %17, %24, %cst_19 {dimension_numbers = #tpu.dot_dimension_numbers<[1], [0], [0], [1], [0, 0, 1, 1], [], []>} : vector<128x128xf32>, vector<128x128xf32>, vector<128x128xf32> -> vector<128x128xf32>
    %c0_20 = arith.constant 0 : index
    %c0_21 = arith.constant 0 : index
    %26 = vector.load %arg7[%c0_20, %c0_21] : memref<20x128xf32, #tpu.memory_space<vmem>>, vector<20x128xf32>
    %cst_22 = arith.constant dense<0.000000e+00> : vector<128x128xf32>
    %27 = tpu.matmul %23, %26, %cst_22 {dimension_numbers = #tpu.dot_dimension_numbers<[1], [0], [0], [1], [0, 0, 1, 1], [], []>} : vector<128x20xf32>, vector<20x128xf32>, vector<128x128xf32> -> vector<128x128xf32>
    %28 = arith.addf %25, %27 : vector<128x128xf32>
    %c0_23 = arith.constant 0 : index
    %c0_24 = arith.constant 0 : index
    %29 = vector.load %arg8[%c0_23, %c0_24] : memref<1x128xf32, #tpu.memory_space<vmem>>, vector<1x128xf32>
    %30 = vector.broadcast %29 : vector<1x128xf32> to vector<128x128xf32>
    %31 = arith.addf %28, %30 : vector<128x128xf32>
    %cst_25 = arith.constant 0.000000e+00 : f32
    %32 = vector.broadcast %cst_25 : f32 to vector<128x128xf32>
    %33 = arith.maximumf %31, %32 : vector<128x128xf32>
    %c0_26 = arith.constant 0 : index
    %c0_27 = arith.constant 0 : index
    %34 = vector.load %arg13[%c0_26, %c0_27] : memref<128x128xi8, #tpu.memory_space<vmem>>, vector<128x128xi8>
    %35 = arith.sitofp %34 : vector<128x128xi8> to vector<128x128xf32>
    %cst_28 = arith.constant 1.250000e+00 : f32
    %36 = vector.broadcast %cst_28 : f32 to vector<128x128xf32>
    %37 = arith.mulf %35, %36 : vector<128x128xf32>
    %38 = arith.mulf %33, %37 : vector<128x128xf32>
    %c0_29 = arith.constant 0 : index
    %c0_30 = arith.constant 0 : index
    %39 = vector.load %arg9[%c0_29, %c0_30] : memref<128x128xf32, #tpu.memory_space<vmem>>, vector<128x128xf32>
    %cst_31 = arith.constant dense<0.000000e+00> : vector<128x128xf32>
    %40 = tpu.matmul %38, %39, %cst_31 {dimension_numbers = #tpu.dot_dimension_numbers<[1], [0], [0], [1], [0, 0, 1, 1], [], []>} : vector<128x128xf32>, vector<128x128xf32>, vector<128x128xf32> -> vector<128x128xf32>
    %c0_32 = arith.constant 0 : index
    %c0_33 = arith.constant 0 : index
    %41 = vector.load %arg10[%c0_32, %c0_33] : memref<1x128xf32, #tpu.memory_space<vmem>>, vector<1x128xf32>
    %42 = vector.broadcast %41 : vector<1x128xf32> to vector<128x128xf32>
    %43 = arith.addf %40, %42 : vector<128x128xf32>
    %cst_34 = arith.constant 5.000000e-01 : f32
    %44 = vector.broadcast %cst_34 : f32 to vector<128x128xf32>
    %45 = arith.mulf %44, %43 : vector<128x128xf32>
    %46 = math.tanh %45 : vector<128x128xf32>
    %cst_35 = arith.constant 1.000000e+00 : f32
    %47 = vector.broadcast %cst_35 : f32 to vector<128x128xf32>
    %48 = arith.addf %46, %47 : vector<128x128xf32>
    %cst_36 = arith.constant 5.000000e-01 : f32
    %49 = vector.broadcast %cst_36 : f32 to vector<128x128xf32>
    %50 = arith.mulf %49, %48 : vector<128x128xf32>
    %51 = tpu.iota {dimensions = array<i32: 1>} : vector<128x128xi32>
    %c40_i32 = arith.constant 40 : i32
    %52 = vector.broadcast %c40_i32 : i32 to vector<128x128xi32>
    %53 = arith.cmpi slt, %51, %52 : vector<128x128xi32>
    %54 = arith.select %53, %17, %50 : vector<128x128xi1>, vector<128x128xf32>
    %c0_37 = arith.constant 0 : index
    %c0_38 = arith.constant 0 : index
    %55 = vector.load %arg14[%c0_37, %c0_38] : memref<128x128xf32, #tpu.memory_space<vmem>>, vector<128x128xf32>
    tpu.vector_store %arg14[%c0_37, %c0_38], %54 {strides = array<i32>} : memref<128x128xf32, #tpu.memory_space<vmem>>, vector<128x128xf32>,
    return
  }
  func.func @transform_0(%arg0: i32) -> (i32, i32) {
    %c0_i32 = arith.constant 0 : i32
    %c0_i32_0 = arith.constant 0 : i32
    return %arg0, %c0_i32 : i32, i32
  }
  func.func @transform_1(%arg0: i32) -> (i32, i32) {
    %c0_i32 = arith.constant 0 : i32
    %c0_i32_0 = arith.constant 0 : i32
    %c0_i32_1 = arith.constant 0 : i32
    return %c0_i32, %c0_i32_0 : i32, i32
  }
  func.func @transform_2(%arg0: i32) -> (i32, i32) {
    %c0_i32 = arith.constant 0 : i32
    %c0_i32_0 = arith.constant 0 : i32
    %c0_i32_1 = arith.constant 0 : i32
    return %c0_i32, %c0_i32_0 : i32, i32
  }
  func.func @transform_3(%arg0: i32) -> (i32, i32) {
    %c0_i32 = arith.constant 0 : i32
    %c0_i32_0 = arith.constant 0 : i32
    %c0_i32_1 = arith.constant 0 : i32
    return %c0_i32, %c0_i32_0 : i32, i32
  }
  func.func @transform_4(%arg0: i32) -> (i32, i32) {
    %c0_i32 = arith.constant 0 : i32
    %c0_i32_0 = arith.constant 0 : i32
    %c0_i32_1 = arith.constant 0 : i32
    return %c0_i32, %c0_i32_0 : i32, i32
  }
  func.func @transform_5(%arg0: i32) -> (i32, i32) {
    %c0_i32 = arith.constant 0 : i32
    %c0_i32_0 = arith.constant 0 : i32
    %c0_i32_1 = arith.constant 0 : i32
    return %c0_i32, %c0_i32_0 : i32, i32
  }
  func.func @transform_6(%arg0: i32) -> (i32, i32) {
    %c0_i32 = arith.constant 0 : i32
    %c0_i32_0 = arith.constant 0 : i32
    %c0_i32_1 = arith.constant 0 : i32
    return %c0_i32, %c0_i32_0 : i32, i32
  }
  func.func @transform_7(%arg0: i32) -> (i32, i32) {
    %c0_i32 = arith.constant 0 : i32
    %c0_i32_0 = arith.constant 0 : i32
    %c0_i32_1 = arith.constant 0 : i32
    return %c0_i32, %c0_i32_0 : i32, i32
  }
  func.func @transform_8(%arg0: i32) -> (i32, i32) {
    %c0_i32 = arith.constant 0 : i32
    %c0_i32_0 = arith.constant 0 : i32
    %c0_i32_1 = arith.constant 0 : i32
    return %c0_i32, %c0_i32_0 : i32, i32
  }
  func.func @transform_9(%arg0: i32) -> (i32, i32) {
    %c0_i32 = arith.constant 0 : i32
    %c0_i32_0 = arith.constant 0 : i32
    %c0_i32_1 = arith.constant 0 : i32
    return %c0_i32, %c0_i32_0 : i32, i32
  }
  func.func @transform_10(%arg0: i32) -> (i32, i32) {
    %c0_i32 = arith.constant 0 : i32
    %c0_i32_0 = arith.constant 0 : i32
    return %arg0, %c0_i32 : i32, i32
  }
  func.func @transform_11(%arg0: i32) -> (i32, i32) {
    %c0_i32 = arith.constant 0 : i32
    %c0_i32_0 = arith.constant 0 : i32
    return %arg0, %c0_i32 : i32, i32
  }
  func.func @transform_12(%arg0: i32) -> (i32, i32) {
    %c0_i32 = arith.constant 0 : i32
    %c0_i32_0 = arith.constant 0 : i32
    return %arg0, %c0_i32 : i32, i32
  }
  func.func @transform_13(%arg0: i32) -> (i32, i32) {
    %c0_i32 = arith.constant 0 : i32
    %c0_i32_0 = arith.constant 0 : i32
    return %arg0, %c0_i32 : i32, i32
  }
}

</mosaic_0001>

<llo_original>
// kernel: tpu_custom_call.1
$region0: #{tpu_custom_call.1}
  #allocation0 [shape = 'u32[]', space=smem, size = 0x4, offset = 0x4, fixed_abs, tag = 'smem constant byte address 0x4 - core index']
  #allocation1 [shape = 'u32[144,128]{1,0:T(1,128)}', space=vmem, size = 0x12000, scoped, tag = 'internal scratch']
  %s0 = inlined_call_operand.vmem [shape: f32[512,32], index: 0, kind: input, shape index: {}]
  %s1 = inlined_call_operand.vmem [shape: f32[32,128], index: 1, kind: input, shape index: {}]
  %s2 = inlined_call_operand.vmem [shape: f32[1,128], index: 2, kind: input, shape index: {}]
  %s3 = inlined_call_operand.vmem [shape: f32[128,128], index: 3, kind: input, shape index: {}]
  %s4 = inlined_call_operand.vmem [shape: f32[1,128], index: 4, kind: input, shape index: {}]
  %s5 = inlined_call_operand.vmem [shape: f32[128,128], index: 5, kind: input, shape index: {}]
  %s6 = inlined_call_operand.vmem [shape: f32[20,128], index: 6, kind: input, shape index: {}]
  %s7 = inlined_call_operand.vmem [shape: f32[1,128], index: 7, kind: input, shape index: {}]
  %s8 = inlined_call_operand.vmem [shape: f32[128,128], index: 8, kind: input, shape index: {}]
  %s9 = inlined_call_operand.vmem [shape: f32[1,128], index: 9, kind: input, shape index: {}]
  %s10 = inlined_call_operand.vmem [shape: f32[512,20], index: 10, kind: input, shape index: {}]
  %s11 = inlined_call_operand.vmem [shape: s8[512,128], index: 11, kind: input, shape index: {}]
  %s12 = inlined_call_operand.vmem [shape: s8[512,128], index: 12, kind: input, shape index: {}]
  %s13 = inlined_call_operand.hbm [shape: f32[512,128], index: 13, kind: output, shape index: {}]
  %s14 = sld [smem:[#allocation0]]
  $region85: #{tpu_custom_call.1} parent=0
    _
  %s16 = ssub.s32 1, %s14
  %s17 = scalar_select 0, %s16, %s14
  $region1: #{tpu_custom_call.1} parent=0
    #allocation2 [shape = 'u8[131072]{0}', space=vmem, size = 0x20000, scoped, tag = 'output window, operand 0']
    #allocation3 [shape = 's32[2]{0}', space=sflag, size = 0x8, scoped, tag = 'scoped memory for tpu_custom_call.1']
    %18 = vsyncpa [#allocation3], 0
    %s19 = scalar_lea.sflag [#allocation3], 1
    %20 = vsyncpa %s19, 0
    loop: start=0, step=1, limit=6
    $region2: #{tpu_custom_call.1} parent=1 // loop_pre_header
      _
    $region3: #{tpu_custom_call.1} parent=1 // loop_header
      %s22 = sphi 0, %s26
      %p23 = scmp.ge.s32.totalorder %s22, 6
      %s32 = sphi 0, %s34
      %s35 = sphi 0, %s32
      %s36 = sphi 0, %s35
      %s52 = sphi 0, %s36
      %s56 = sphi 0, %s56
      %s58 = sphi 0, %s56
      %s59 = sphi 0, %s58
      %s73 = sphi 0, %s59
      %s77 = sphi 0, %s77
      %s79 = sphi 0, %s77
      %s80 = sphi 0, %s79
      %s94 = sphi 0, %s80
      %s98 = sphi 0, %s98
      %s100 = sphi 0, %s98
      %s101 = sphi 0, %s100
      %s115 = sphi 0, %s101
      %s119 = sphi 0, %s119
      %s121 = sphi 0, %s119
      %s122 = sphi 0, %s121
      %s136 = sphi 0, %s122
      %s140 = sphi 0, %s140
      %s142 = sphi 0, %s140
      %s143 = sphi 0, %s142
      %s157 = sphi 0, %s143
      %s161 = sphi 0, %s161
      %s163 = sphi 0, %s161
      %s164 = sphi 0, %s163
      %s178 = sphi 0, %s164
      %s182 = sphi 0, %s182
      %s184 = sphi 0, %s182
      %s185 = sphi 0, %s184
      %s199 = sphi 0, %s185
      %s203 = sphi 0, %s203
      %s205 = sphi 0, %s203
      %s206 = sphi 0, %s205
      %s220 = sphi 0, %s206
      %s224 = sphi 0, %s224
      %s226 = sphi 0, %s224
      %s227 = sphi 0, %s226
      %s241 = sphi 0, %s227
      %s247 = sphi 0, %s249
      %s250 = sphi 0, %s247
      %s251 = sphi 0, %s250
      %s267 = sphi 0, %s251
      %s273 = sphi 0, %s275
      %s276 = sphi 0, %s273
      %s277 = sphi 0, %s276
      %s293 = sphi 0, %s277
      %s299 = sphi 0, %s301
      %s302 = sphi 0, %s299
      %s303 = sphi 0, %s302
      %s319 = sphi 0, %s303
      %s325 = sphi 0, %s327
      %s328 = sphi 0, %s325
      %s329 = sphi 0, %s328
      %s345 = sphi 0, %s329
    $region4: #{tpu_custom_call.1} parent=1 // loop_header_branch
      %25 = sbr.rel (%p23) target = $region8
    $region5: #{tpu_custom_call.1} parent=1 // loop_body
      %s27 = ssub.s32 %s22, 1
      %s28 = ssub.s32 %s22, 2
      %s29 = sadd.s32 %s22, 1
      %s30 = ssub.s32 %s22, %s29
      %p31 = scmp.eq.s32.totalorder %s30, 0
      %s33 = sadd.s32 %s32, 1
      %s34 = scalar_select %p31, %s32, %s33
      %p37 = pneg %p31
      %p38 = scmp.eq.s32.totalorder %s22, 3
      %p39 = por %p37, %p38
      %p40 = scmp.ne.s32.totalorder %s32, %s35
      %p41 = scmp.eq.s32.totalorder %s22, 0
      %p42 = por %p40, %p41
      %p43 = scmp.ne.s32.totalorder %s32, %s35
      %p44 = scmp.eq.s32.totalorder %s27, 3
      %p45 = por %p43, %p44
      %p46 = scmp.ne.s32.totalorder %s35, %s36
      %p47 = scmp.eq.s32.totalorder %s27, 0
      %p48 = por %p46, %p47
      %p49 = scmp.ne.s32.totalorder %s35, %s36
      %p50 = scmp.eq.s32.totalorder %s28, 3
      %p51 = por %p49, %p50
      %p53 = scmp.ne.s32.totalorder %s36, %s52
      %p54 = scmp.eq.s32.totalorder %s28, 0
      %p55 = por %p53, %p54
      %s57 = sadd.s32 %s56, 1
      %p60 = scmp.eq.s32.totalorder %s22, 3
      %p61 = scmp.ne.s32.totalorder %s56, %s58
      %p62 = scmp.eq.s32.totalorder %s22, 0
      %p63 = por %p61, %p62
      %p64 = scmp.ne.s32.totalorder %s56, %s58
      %p65 = scmp.eq.s32.totalorder %s27, 3
      %p66 = por %p64, %p65
      %p67 = scmp.ne.s32.totalorder %s58, %s59
      %p68 = scmp.eq.s32.totalorder %s27, 0
      %p69 = por %p67, %p68
      %p70 = scmp.ne.s32.totalorder %s58, %s59
      %p71 = scmp.eq.s32.totalorder %s28, 3
      %p72 = por %p70, %p71
      %p74 = scmp.ne.s32.totalorder %s59, %s73
      %p75 = scmp.eq.s32.totalorder %s28, 0
      %p76 = por %p74, %p75
      %s78 = sadd.s32 %s77, 1
      %p81 = scmp.eq.s32.totalorder %s22, 3
      %p82 = scmp.ne.s32.totalorder %s77, %s79
      %p83 = scmp.eq.s32.totalorder %s22, 0
      %p84 = por %p82, %p83
      %p85 = scmp.ne.s32.totalorder %s77, %s79
      %p86 = scmp.eq.s32.totalorder %s27, 3
      %p87 = por %p85, %p86
      %p88 = scmp.ne.s32.totalorder %s79, %s80
      %p89 = scmp.eq.s32.totalorder %s27, 0
      %p90 = por %p88, %p89
      %p91 = scmp.ne.s32.totalorder %s79, %s80
      %p92 = scmp.eq.s32.totalorder %s28, 3
      %p93 = por %p91, %p92
      %p95 = scmp.ne.s32.totalorder %s80, %s94
      %p96 = scmp.eq.s32.totalorder %s28, 0
      %p97 = por %p95, %p96
      %s99 = sadd.s32 %s98, 1
      %p102 = scmp.eq.s32.totalorder %s22, 3
      %p103 = scmp.ne.s32.totalorder %s98, %s100
      %p104 = scmp.eq.s32.totalorder %s22, 0
      %p105 = por %p103, %p104
      %p106 = scmp.ne.s32.totalorder %s98, %s100
      %p107 = scmp.eq.s32.totalorder %s27, 3
      %p108 = por %p106, %p107
      %p109 = scmp.ne.s32.totalorder %s100, %s101
      %p110 = scmp.eq.s32.totalorder %s27, 0
      %p111 = por %p109, %p110
      %p112 = scmp.ne.s32.totalorder %s100, %s101
      %p113 = scmp.eq.s32.totalorder %s28, 3
      %p114 = por %p112, %p113
      %p116 = scmp.ne.s32.totalorder %s101, %s115
      %p117 = scmp.eq.s32.totalorder %s28, 0
      %p118 = por %p116, %p117
      %s120 = sadd.s32 %s119, 1
      %p123 = scmp.eq.s32.totalorder %s22, 3
      %p124 = scmp.ne.s32.totalorder %s119, %s121
      %p125 = scmp.eq.s32.totalorder %s22, 0
      %p126 = por %p124, %p125
      %p127 = scmp.ne.s32.totalorder %s119, %s121
      %p128 = scmp.eq.s32.totalorder %s27, 3
      %p129 = por %p127, %p128
      %p130 = scmp.ne.s32.totalorder %s121, %s122
      %p131 = scmp.eq.s32.totalorder %s27, 0
      %p132 = por %p130, %p131
      %p133 = scmp.ne.s32.totalorder %s121, %s122
      %p134 = scmp.eq.s32.totalorder %s28, 3
      %p135 = por %p133, %p134
      %p137 = scmp.ne.s32.totalorder %s122, %s136
      %p138 = scmp.eq.s32.totalorder %s28, 0
      %p139 = por %p137, %p138
      %s141 = sadd.s32 %s140, 1
      %p144 = scmp.eq.s32.totalorder %s22, 3
      %p145 = scmp.ne.s32.totalorder %s140, %s142
      %p146 = scmp.eq.s32.totalorder %s22, 0
      %p147 = por %p145, %p146
      %p148 = scmp.ne.s32.totalorder %s140, %s142
      %p149 = scmp.eq.s32.totalorder %s27, 3
      %p150 = por %p148, %p149
      %p151 = scmp.ne.s32.totalorder %s142, %s143
      %p152 = scmp.eq.s32.totalorder %s27, 0
      %p153 = por %p151, %p152
      %p154 = scmp.ne.s32.totalorder %s142, %s143
      %p155 = scmp.eq.s32.totalorder %s28, 3
      %p156 = por %p154, %p155
      %p158 = scmp.ne.s32.totalorder %s143, %s157
      %p159 = scmp.eq.s32.totalorder %s28, 0
      %p160 = por %p158, %p159
      %s162 = sadd.s32 %s161, 1
      %p165 = scmp.eq.s32.totalorder %s22, 3
      %p166 = scmp.ne.s32.totalorder %s161, %s163
      %p167 = scmp.eq.s32.totalorder %s22, 0
      %p168 = por %p166, %p167
      %p169 = scmp.ne.s32.totalorder %s161, %s163
      %p170 = scmp.eq.s32.totalorder %s27, 3
      %p171 = por %p169, %p170
      %p172 = scmp.ne.s32.totalorder %s163, %s164
      %p173 = scmp.eq.s32.totalorder %s27, 0
      %p174 = por %p172, %p173
      %p175 = scmp.ne.s32.totalorder %s163, %s164
      %p176 = scmp.eq.s32.totalorder %s28, 3
      %p177 = por %p175, %p176
      %p179 = scmp.ne.s32.totalorder %s164, %s178
      %p180 = scmp.eq.s32.totalorder %s28, 0
      %p181 = por %p179, %p180
      %s183 = sadd.s32 %s182, 1
      %p186 = scmp.eq.s32.totalorder %s22, 3
      %p187 = scmp.ne.s32.totalorder %s182, %s184
      %p188 = scmp.eq.s32.totalorder %s22, 0
      %p189 = por %p187, %p188
      %p190 = scmp.ne.s32.totalorder %s182, %s184
      %p191 = scmp.eq.s32.totalorder %s27, 3
      %p192 = por %p190, %p191
      %p193 = scmp.ne.s32.totalorder %s184, %s185
      %p194 = scmp.eq.s32.totalorder %s27, 0
      %p195 = por %p193, %p194
      %p196 = scmp.ne.s32.totalorder %s184, %s185
      %p197 = scmp.eq.s32.totalorder %s28, 3
      %p198 = por %p196, %p197
      %p200 = scmp.ne.s32.totalorder %s185, %s199
      %p201 = scmp.eq.s32.totalorder %s28, 0
      %p202 = por %p200, %p201
      %s204 = sadd.s32 %s203, 1
      %p207 = scmp.eq.s32.totalorder %s22, 3
      %p208 = scmp.ne.s32.totalorder %s203, %s205
      %p209 = scmp.eq.s32.totalorder %s22, 0
      %p210 = por %p208, %p209
      %p211 = scmp.ne.s32.totalorder %s203, %s205
      %p212 = scmp.eq.s32.totalorder %s27, 3
      %p213 = por %p211, %p212
      %p214 = scmp.ne.s32.totalorder %s205, %s206
      %p215 = scmp.eq.s32.totalorder %s27, 0
      %p216 = por %p214, %p215
      %p217 = scmp.ne.s32.totalorder %s205, %s206
      %p218 = scmp.eq.s32.totalorder %s28, 3
      %p219 = por %p217, %p218
      %p221 = scmp.ne.s32.totalorder %s206, %s220
      %p222 = scmp.eq.s32.totalorder %s28, 0
      %p223 = por %p221, %p222
      %s225 = sadd.s32 %s224, 1
      %p228 = scmp.eq.s32.totalorder %s22, 3
      %p229 = scmp.ne.s32.totalorder %s224, %s226
      %p230 = scmp.eq.s32.totalorder %s22, 0
      %p231 = por %p229, %p230
      %p232 = scmp.ne.s32.totalorder %s224, %s226
      %p233 = scmp.eq.s32.totalorder %s27, 3
      %p234 = por %p232, %p233
      %p235 = scmp.ne.s32.totalorder %s226, %s227
      %p236 = scmp.eq.s32.totalorder %s27, 0
      %p237 = por %p235, %p236
      %p238 = scmp.ne.s32.totalorder %s226, %s227
      %p239 = scmp.eq.s32.totalorder %s28, 3
      %p240 = por %p238, %p239
      %p242 = scmp.ne.s32.totalorder %s227, %s241
      %p243 = scmp.eq.s32.totalorder %s28, 0
      %p244 = por %p242, %p243
      %s245 = ssub.s32 %s22, %s29
      %p246 = scmp.eq.s32.totalorder %s245, 0
      %s248 = sadd.s32 %s247, 1
      %s249 = scalar_select %p246, %s247, %s248
      %p252 = pneg %p246
      %p253 = scmp.eq.s32.totalorder %s22, 3
      %p254 = por %p252, %p253
      %p255 = scmp.ne.s32.totalorder %s247, %s250
      %p256 = scmp.eq.s32.totalorder %s22, 0
      %p257 = por %p255, %p256
      %p258 = scmp.ne.s32.totalorder %s247, %s250
      %p259 = scmp.eq.s32.totalorder %s27, 3
      %p260 = por %p258, %p259
      %p261 = scmp.ne.s32.totalorder %s250, %s251
      %p262 = scmp.eq.s32.totalorder %s27, 0
      %p263 = por %p261, %p262
      %p264 = scmp.ne.s32.totalorder %s250, %s251
      %p265 = scmp.eq.s32.totalorder %s28, 3
      %p266 = por %p264, %p265
      %p268 = scmp.ne.s32.totalorder %s251, %s267
      %p269 = scmp.eq.s32.totalorder %s28, 0
      %p270 = por %p268, %p269
      %s271 = ssub.s32 %s22, %s29
      %p272 = scmp.eq.s32.totalorder %s271, 0
      %s274 = sadd.s32 %s273, 1
      %s275 = scalar_select %p272, %s273, %s274
      %p278 = pneg %p272
      %p279 = scmp.eq.s32.totalorder %s22, 3
      %p280 = por %p278, %p279
      %p281 = scmp.ne.s32.totalorder %s273, %s276
      %p282 = scmp.eq.s32.totalorder %s22, 0
      %p283 = por %p281, %p282
      %p284 = scmp.ne.s32.totalorder %s273, %s276
      %p285 = scmp.eq.s32.totalorder %s27, 3
      %p286 = por %p284, %p285
      %p287 = scmp.ne.s32.totalorder %s276, %s277
      %p288 = scmp.eq.s32.totalorder %s27, 0
      %p289 = por %p287, %p288
      %p290 = scmp.ne.s32.totalorder %s276, %s277
      %p291 = scmp.eq.s32.totalorder %s28, 3
      %p292 = por %p290, %p291
      %p294 = scmp.ne.s32.totalorder %s277, %s293
      %p295 = scmp.eq.s32.totalorder %s28, 0
      %p296 = por %p294, %p295
      %s297 = ssub.s32 %s22, %s29
      %p298 = scmp.eq.s32.totalorder %s297, 0
      %s300 = sadd.s32 %s299, 1
      %s301 = scalar_select %p298, %s299, %s300
      %p304 = pneg %p298
      %p305 = scmp.eq.s32.totalorder %s22, 3
      %p306 = por %p304, %p305
      %p307 = scmp.ne.s32.totalorder %s299, %s302
      %p308 = scmp.eq.s32.totalorder %s22, 0
      %p309 = por %p307, %p308
      %p310 = scmp.ne.s32.totalorder %s299, %s302
      %p311 = scmp.eq.s32.totalorder %s27, 3
      %p312 = por %p310, %p311
      %p313 = scmp.ne.s32.totalorder %s302, %s303
      %p314 = scmp.eq.s32.totalorder %s27, 0
      %p315 = por %p313, %p314
      %p316 = scmp.ne.s32.totalorder %s302, %s303
      %p317 = scmp.eq.s32.totalorder %s28, 3
      %p318 = por %p316, %p317
      %p320 = scmp.ne.s32.totalorder %s303, %s319
      %p321 = scmp.eq.s32.totalorder %s28, 0
      %p322 = por %p320, %p321
      %s323 = ssub.s32 %s22, %s29
      %p324 = scmp.eq.s32.totalorder %s323, 0
      %s326 = sadd.s32 %s325, 1
      %s327 = scalar_select %p324, %s325, %s326
      %p330 = pneg %p324
      %p331 = scmp.eq.s32.totalorder %s22, 3
      %p332 = por %p330, %p331
      %p333 = scmp.ne.s32.totalorder %s325, %s328
      %p334 = scmp.eq.s32.totalorder %s22, 0
      %p335 = por %p333, %p334
      %p336 = scmp.ne.s32.totalorder %s325, %s328
      %p337 = scmp.eq.s32.totalorder %s27, 3
      %p338 = por %p336, %p337
      %p339 = scmp.ne.s32.totalorder %s328, %s329
      %p340 = scmp.eq.s32.totalorder %s27, 0
      %p341 = por %p339, %p340
      %p342 = scmp.ne.s32.totalorder %s328, %s329
      %p343 = scmp.eq.s32.totalorder %s28, 3
      %p344 = por %p342, %p343
      %p346 = scmp.ne.s32.totalorder %s329, %s345
      %p347 = scmp.eq.s32.totalorder %s28, 0
      %p348 = por %p346, %p347
      %p349 = scmp.le.s32.totalorder 1, %s22
      %p350 = scmp.lt.s32.totalorder %s22, 5
      %p351 = pnand %p349, %p350
      %p352 = pneg %p351
      // Predicated region
      $region9: #{tpu_custom_call.1} parent=5 // pred_check
        _
      $region10: #{tpu_custom_call.1} parent=5 // pred_check_branch
        %354 = sbr.rel (%p351) target = $region12
      $region11: #{tpu_custom_call.1} parent=5 // pred_region
        %s355 = ssub.s32 %s22, 1
        // Predicated region
        $region13: #{tpu_custom_call.1} parent=11 // pred_check
          %p356 = pneg %p69
        $region14: #{tpu_custom_call.1} parent=11 // pred_check_branch
          %358 = sbr.rel (%p356) target = $region16
        $region15: #{tpu_custom_call.1} parent=11 // pred_region
          _
        $region16: #{tpu_custom_call.1} parent=11 // pred_fallthru
          _
        // Predicated region
        $region17: #{tpu_custom_call.1} parent=11 // pred_check
          %p359 = pneg %p90
        $region18: #{tpu_custom_call.1} parent=11 // pred_check_branch
          %361 = sbr.rel (%p359) target = $region20
        $region19: #{tpu_custom_call.1} parent=11 // pred_region
          _
        $region20: #{tpu_custom_call.1} parent=11 // pred_fallthru
          _
        // Predicated region
        $region21: #{tpu_custom_call.1} parent=11 // pred_check
          %p362 = pneg %p111
        $region22: #{tpu_custom_call.1} parent=11 // pred_check_branch
          %364 = sbr.rel (%p362) target = $region24
        $region23: #{tpu_custom_call.1} parent=11 // pred_region
          _
        $region24: #{tpu_custom_call.1} parent=11 // pred_fallthru
          _
        // Predicated region
        $region25: #{tpu_custom_call.1} parent=11 // pred_check
          %p365 = pneg %p132
        $region26: #{tpu_custom_call.1} parent=11 // pred_check_branch
          %367 = sbr.rel (%p365) target = $region28
        $region27: #{tpu_custom_call.1} parent=11 // pred_region
          _
        $region28: #{tpu_custom_call.1} parent=11 // pred_fallthru
          _
        // Predicated region
        $region29: #{tpu_custom_call.1} parent=11 // pred_check
          %p368 = pneg %p153
        $region30: #{tpu_custom_call.1} parent=11 // pred_check_branch
          %370 = sbr.rel (%p368) target = $region32
        $region31: #{tpu_custom_call.1} parent=11 // pred_region
          _
        $region32: #{tpu_custom_call.1} parent=11 // pred_fallthru
          _
        // Predicated region
        $region33: #{tpu_custom_call.1} parent=11 // pred_check
          %p371 = pneg %p174
        $region34: #{tpu_custom_call.1} parent=11 // pred_check_branch
          %373 = sbr.rel (%p371) target = $region36
        $region35: #{tpu_custom_call.1} parent=11 // pred_region
          _
        $region36: #{tpu_custom_call.1} parent=11 // pred_fallthru
          _
        // Predicated region
        $region37: #{tpu_custom_call.1} parent=11 // pred_check
          %p374 = pneg %p195
        $region38: #{tpu_custom_call.1} parent=11 // pred_check_branch
          %376 = sbr.rel (%p374) target = $region40
        $region39: #{tpu_custom_call.1} parent=11 // pred_region
          _
        $region40: #{tpu_custom_call.1} parent=11 // pred_fallthru
          _
        // Predicated region
        $region41: #{tpu_custom_call.1} parent=11 // pred_check
          %p377 = pneg %p216
        $region42: #{tpu_custom_call.1} parent=11 // pred_check_branch
          %379 = sbr.rel (%p377) target = $region44
        $region43: #{tpu_custom_call.1} parent=11 // pred_region
          _
        $region44: #{tpu_custom_call.1} parent=11 // pred_fallthru
          _
        // Predicated region
        $region45: #{tpu_custom_call.1} parent=11 // pred_check
          %p380 = pneg %p237
        $region46: #{tpu_custom_call.1} parent=11 // pred_check_branch
          %382 = sbr.rel (%p380) target = $region48
        $region47: #{tpu_custom_call.1} parent=11 // pred_region
          _
        $region48: #{tpu_custom_call.1} parent=11 // pred_fallthru
          _
      $region12: #{tpu_custom_call.1} parent=5 // pred_fallthru
        _
      %p383 = scmp.lt.s32.totalorder %s22, 4
      // Predicated region
      $region49: #{tpu_custom_call.1} parent=5 // pred_check
        %p384 = pneg %p383
      $region50: #{tpu_custom_call.1} parent=5 // pred_check_branch
        %386 = sbr.rel (%p384) target = $region52
      $region51: #{tpu_custom_call.1} parent=5 // pred_region
        // Predicated region
        $region53: #{tpu_custom_call.1} parent=51 // pred_check
          %p387 = pneg %p42
        $region54: #{tpu_custom_call.1} parent=51 // pred_check_branch
          %389 = sbr.rel (%p387) target = $region56
        $region55: #{tpu_custom_call.1} parent=51 // pred_region
          %s390 = smul.u32 16, %s22
          %p391 = scmp.lt.s32.totalorder %s390, 63
          %s392 = scalar_select %p391, %s390, 63
          %s393 = smul.addr %s392, 8
          %s394 = scalar_lea.vmem %s0, %s393
          %s395 = smul.u32 16, %s22
        $region56: #{tpu_custom_call.1} parent=51 // pred_fallthru
          _
        // Predicated region
        $region57: #{tpu_custom_call.1} parent=51 // pred_check
          %p396 = pneg %p257
        $region58: #{tpu_custom_call.1} parent=51 // pred_check_branch
          %398 = sbr.rel (%p396) target = $region60
        $region59: #{tpu_custom_call.1} parent=51 // pred_region
          %s399 = smul.u32 16, %s22
          %p400 = scmp.lt.s32.totalorder %s399, 63
          %s401 = scalar_select %p400, %s399, 63
          %s402 = smul.addr %s401, 8
          %s403 = scalar_lea.vmem %s10, %s402
          %s404 = smul.u32 16, %s22
        $region60: #{tpu_custom_call.1} parent=51 // pred_fallthru
          _
        // Predicated region
        $region61: #{tpu_custom_call.1} parent=51 // pred_check
          %p405 = pneg %p283
        $region62: #{tpu_custom_call.1} parent=51 // pred_check_branch
          %407 = sbr.rel (%p405) target = $region64
        $region63: #{tpu_custom_call.1} parent=51 // pred_region
          %s408 = smul.u32 4, %s22
          %p409 = scmp.lt.s32.totalorder %s408, 15
          %s410 = scalar_select %p409, %s408, 15
          %s411 = smul.addr %s410, 8
          %s412 = scalar_lea.vmem %s11, %s411
          %s413 = smul.u32 4, %s22
        $region64: #{tpu_custom_call.1} parent=51 // pred_fallthru
          _
        // Predicated region
        $region65: #{tpu_custom_call.1} parent=51 // pred_check
          %p414 = pneg %p309
        $region66: #{tpu_custom_call.1} parent=51 // pred_check_branch
          %416 = sbr.rel (%p414) target = $region68
        $region67: #{tpu_custom_call.1} parent=51 // pred_region
          %s417 = smul.u32 4, %s22
          %p418 = scmp.lt.s32.totalorder %s417, 15
          %s419 = scalar_select %p418, %s417, 15
          %s420 = smul.addr %s419, 8
          %s421 = scalar_lea.vmem %s12, %s420
          %s422 = smul.u32 4, %s22
        $region68: #{tpu_custom_call.1} parent=51 // pred_fallthru
          _
      $region52: #{tpu_custom_call.1} parent=5 // pred_fallthru
        _
      %p423 = scmp.le.s32.totalorder 1, %s22
      %p424 = scmp.lt.s32.totalorder %s22, 5
      %p425 = pnand %p423, %p424
      %p426 = pneg %p425
      // Predicated region
      $region69: #{tpu_custom_call.1} parent=5 // pred_check
        _
      $region70: #{tpu_custom_call.1} parent=5 // pred_check_branch
        %428 = sbr.rel (%p425) target = $region72
      $region71: #{tpu_custom_call.1} parent=5 // pred_region
        %s429 = ssub.s32 %s22, 1
        %s430 = smul.u32 16, %s27
        %p431 = scmp.lt.s32.totalorder %s430, 63
        %s432 = scalar_select %p431, %s430, 63
        %s433 = smul.addr %s432, 8
        %s434 = scalar_lea.vmem %s0, %s433
        %p435 = pneg %p48
        %p436 = pneg %p45
        %p437 = pneg %p69
        %p438 = pneg %p66
        %p439 = pneg %p90
        %p440 = pneg %p87
        %p441 = pneg %p111
        %p442 = pneg %p108
        %p443 = pneg %p132
        %p444 = pneg %p129
        %p445 = pneg %p153
        %p446 = pneg %p150
        %p447 = pneg %p174
        %p448 = pneg %p171
        %p449 = pneg %p195
        %p450 = pneg %p192
        %p451 = pneg %p216
        %p452 = pneg %p213
        %p453 = pneg %p237
        %p454 = pneg %p234
        %s455 = smul.u32 16, %s27
        %p456 = scmp.lt.s32.totalorder %s455, 63
        %s457 = scalar_select %p456, %s455, 63
        %s458 = smul.addr %s457, 8
        %s459 = scalar_lea.vmem %s10, %s458
        %p460 = pneg %p263
        %p461 = pneg %p260
        %s462 = smul.u32 4, %s27
        %p463 = scmp.lt.s32.totalorder %s462, 15
        %s464 = scalar_select %p463, %s462, 15
        %s465 = smul.addr %s464, 8
        %s466 = scalar_lea.vmem %s11, %s465
        %p467 = pneg %p289
        %p468 = pneg %p286
        %s469 = smul.u32 4, %s27
        %p470 = scmp.lt.s32.totalorder %s469, 15
        %s471 = scalar_select %p470, %s469, 15
        %s472 = smul.addr %s471, 8
        %s473 = scalar_lea.vmem %s12, %s472
        %p474 = pneg %p315
        %p475 = pneg %p312
        %p476 = pneg %p341
        %p477 = pneg %p338
        %s478 = sand.u32 %s328, 1
        %s479 = scalar_lea.sflag [#allocation3], %s478
        %s480 = sand.u32 %s328, 1
        %s481 = smul.addr %s480, 128
        %s482 = scalar_lea.vmem [#allocation2], %s481
        %s483 = smul.u32 16, %s27
        %p484 = scmp.lt.s32.totalorder %s483, 63
        %s485 = scalar_select %p484, %s483, 63
        %s486 = smul.addr %s485, 8
        %s487 = scalar_lea.vmem %s0, %s486
        %s488 = smul.u32 16, %s27
        %s489 = smul.u32 16, %s27
        %p490 = scmp.lt.s32.totalorder %s489, 63
        %s491 = scalar_select %p490, %s489, 63
        %s492 = smul.addr %s491, 8
        %s493 = scalar_lea.vmem %s10, %s492
        %s494 = smul.u32 16, %s27
        %s495 = smul.u32 4, %s27
        %p496 = scmp.lt.s32.totalorder %s495, 15
        %s497 = scalar_select %p496, %s495, 15
        %s498 = smul.addr %s497, 8
        %s499 = scalar_lea.vmem %s11, %s498
        %s500 = smul.u32 4, %s27
        %s501 = smul.u32 4, %s27
        %p502 = scmp.lt.s32.totalorder %s501, 15
        %s503 = scalar_select %p502, %s501, 15
        %s504 = smul.addr %s503, 8
        %s505 = scalar_lea.vmem %s12, %s504
        %s506 = smul.u32 4, %s27
        %s507 = smul.u32 16, %s27
        %v508 = vld [vmem:[%s487] sm:$0xff]
        %v509 = vld [vmem:[%s487 + $0x8] sm:$0xff]
        %v510 = vld [vmem:[%s487 + $0x10] sm:$0xff]
        %v511 = vld [vmem:[%s487 + $0x18] sm:$0xff]
        %v512 = vld [vmem:[%s487 + $0x20] sm:$0xff]
        %v513 = vld [vmem:[%s487 + $0x28] sm:$0xff]
        %v514 = vld [vmem:[%s487 + $0x30] sm:$0xff]
        %v515 = vld [vmem:[%s487 + $0x38] sm:$0xff]
        %v516 = vld [vmem:[%s487 + $0x40] sm:$0xff]
        %v517 = vld [vmem:[%s487 + $0x48] sm:$0xff]
        %v518 = vld [vmem:[%s487 + $0x50] sm:$0xff]
        %v519 = vld [vmem:[%s487 + $0x58] sm:$0xff]
        %v520 = vld [vmem:[%s487 + $0x60] sm:$0xff]
        %v521 = vld [vmem:[%s487 + $0x68] sm:$0xff]
        %v522 = vld [vmem:[%s487 + $0x70] sm:$0xff]
        %v523 = vld [vmem:[%s487 + $0x78] sm:$0xff]
        %v524 = vld [vmem:[%s1] sm:$0xff]
        %v525 = vld [vmem:[%s1 + $0x8] sm:$0xff]
        %v526 = vld [vmem:[%s1 + $0x10] sm:$0xff]
        %v527 = vld [vmem:[%s1 + $0x18] sm:$0xff]
        %v528 = vld [vmem:[%s2] sm:$0x1]
        %v530 = vlaneseq
        %v531 = vshrl.u32 %v530, 7
        %v532 = vsub.s32 0, %v531
        %v533 = vrot.slane %v528, %v532
        %vm535 = vcmask 261120
        %v537 = vsel %vm535, %v508, 0
        %v540 = vsel %vm535, %v509, 0
        %v543 = vsel %vm535, %v510, 0
        %v546 = vsel %vm535, %v511, 0
        %v549 = vsel %vm535, %v512, 0
        %v552 = vsel %vm535, %v513, 0
        %v555 = vsel %vm535, %v514, 0
        %v558 = vsel %vm535, %v515, 0
        %v561 = vsel %vm535, %v516, 0
        %v564 = vsel %vm535, %v517, 0
        %v567 = vsel %vm535, %v518, 0
        %v570 = vsel %vm535, %v519, 0
        %v573 = vsel %vm535, %v520, 0
        %v576 = vsel %vm535, %v521, 0
        %v579 = vsel %vm535, %v522, 0
        %v582 = vsel %vm535, %v523, 0
        %584 = vmatprep.subr.mxu0 0.0
        %585 = vmatpush1.msra.mxu0 0.0
        %586 = vmatprep.subr.mxu0 0.0
        %587 = vmatpush1.msra.mxu0 0.0
        %588 = vmatprep.subr.mxu0 0.0
        %589 = vmatpush1.msra.mxu0 0.0
        %590 = vmatprep.subr.mxu0 0.0
        %591 = vmatpush1.msra.mxu0 0.0
        %592 = vmatprep.subr.mxu0 0.0
        %593 = vmatpush1.msra.mxu0 0.0
        %594 = vmatprep.subr.mxu0 0.0
        %595 = vmatpush1.msra.mxu0 0.0
        %596 = vmatprep.subr.mxu0 0.0
        %597 = vmatpush1.msra.mxu0 0.0
        %598 = vmatprep.subr.mxu0 0.0
        %599 = vmatpush1.msra.mxu0 0.0
        %600 = vmatprep.subr.mxu0 0.0
        %601 = vmatpush1.msra.mxu0 0.0
        %602 = vmatprep.subr.mxu0 0.0
        %603 = vmatpush1.msra.mxu0 0.0
        %604 = vmatprep.subr.mxu0 0.0
        %605 = vmatpush1.msra.mxu0 0.0
        %606 = vmatprep.subr.mxu0 0.0
        %607 = vmatpush1.msra.mxu0 0.0
        %608 = vmatprep.subr.mxu0 0.0
        %609 = vmatpush1.msra.mxu0 %v527
        %610 = vmatprep.subr.mxu0 0.0
        %611 = vmatpush1.msra.mxu0 %v526
        %612 = vmatprep.subr.mxu0 0.0
        %613 = vmatpush1.msra.mxu0 %v525
        %614 = vmatprep.subr.mxu0 0.0
        %615 = vmatpush1.msra.mxu0 %v524
        %616 = vmatprep.subr.mxu0 0.0
        %617 = vmatpush2.msra.mxu0 0.0
        %618 = vmatprep.subr.mxu0 0.0
        %619 = vmatpush2.msra.mxu0 0.0
        %620 = vmatprep.subr.mxu0 0.0
        %621 = vmatpush2.msra.mxu0 0.0
        %622 = vmatprep.subr.mxu0 0.0
        %623 = vmatpush2.msra.mxu0 0.0
        %624 = vmatprep.subr.mxu0 0.0
        %625 = vmatpush2.msra.mxu0 0.0
        %626 = vmatprep.subr.mxu0 0.0
        %627 = vmatpush2.msra.mxu0 0.0
        %628 = vmatprep.subr.mxu0 0.0
        %629 = vmatpush2.msra.mxu0 0.0
        %630 = vmatprep.subr.mxu0 0.0
        %631 = vmatpush2.msra.mxu0 0.0
        %632 = vmatprep.subr.mxu0 0.0
        %633 = vmatpush2.msra.mxu0 0.0
        %634 = vmatprep.subr.mxu0 0.0
        %635 = vmatpush2.msra.mxu0 0.0
        %636 = vmatprep.subr.mxu0 0.0
        %637 = vmatpush2.msra.mxu0 0.0
        %638 = vmatprep.subr.mxu0 0.0
        %639 = vmatpush2.msra.mxu0 0.0
        %640 = vmatprep.subr.mxu0 0.0
        %641 = vmatpush2.msra.mxu0 0.0
        %642 = vmatprep.subr.mxu0 0.0
        %643 = vmatpush2.msra.mxu0 0.0
        %644 = vmatprep.subr.mxu0 0.0
        %645 = vmatpush2.msra.mxu0 0.0
        %646 = vmatprep.subr.mxu0 0.0
        %647 = vmatpush2.msra.mxu0 0.0
        %648 = vmatprep.mubr.f32.mxu0 0.0
        %649 = vmatmul.mubr.f32.gmra.mxu0 %v537
        %v650 = vpop.f32.mrf.mxu0
        %v651 = vadd.f32 %v533, %v650
        %v652 = vpop.f32.mrf.mxu0
        %653 = vmatprep.mubr.f32.mxu0 0.0
        %654 = vmatmul.mubr.f32.gmra.mxu0 %v540
        %v655 = vpop.f32.mrf.mxu0
        %v656 = vadd.f32 %v533, %v655
        %v657 = vpop.f32.mrf.mxu0
        %658 = vmatprep.mubr.f32.mxu0 0.0
        %659 = vmatmul.mubr.f32.gmra.mxu0 %v543
        %v660 = vpop.f32.mrf.mxu0
        %v661 = vadd.f32 %v533, %v660
        %v662 = vpop.f32.mrf.mxu0
        %663 = vmatprep.mubr.f32.mxu0 0.0
        %664 = vmatmul.mubr.f32.gmra.mxu0 %v546
        %v665 = vpop.f32.mrf.mxu0
        %v666 = vadd.f32 %v533, %v665
        %v667 = vpop.f32.mrf.mxu0
        %668 = vmatprep.mubr.f32.mxu0 0.0
        %669 = vmatmul.mubr.f32.gmra.mxu0 %v549
        %v670 = vpop.f32.mrf.mxu0
        %v671 = vadd.f32 %v533, %v670
        %v672 = vpop.f32.mrf.mxu0
        %673 = vmatprep.mubr.f32.mxu0 0.0
        %674 = vmatmul.mubr.f32.gmra.mxu0 %v552
        %v675 = vpop.f32.mrf.mxu0
        %v676 = vadd.f32 %v533, %v675
        %v677 = vpop.f32.mrf.mxu0
        %678 = vmatprep.mubr.f32.mxu0 0.0
        %679 = vmatmul.mubr.f32.gmra.mxu0 %v555
        %v680 = vpop.f32.mrf.mxu0
        %v681 = vadd.f32 %v533, %v680
        %v682 = vpop.f32.mrf.mxu0
        %683 = vmatprep.mubr.f32.mxu0 0.0
        %684 = vmatmul.mubr.f32.gmra.mxu0 %v558
        %v685 = vpop.f32.mrf.mxu0
        %v686 = vadd.f32 %v533, %v685
        %v687 = vpop.f32.mrf.mxu0
        %688 = vmatprep.mubr.f32.mxu0 0.0
        %689 = vmatmul.mubr.f32.gmra.mxu0 %v561
        %v690 = vpop.f32.mrf.mxu0
        %v691 = vadd.f32 %v533, %v690
        %v692 = vpop.f32.mrf.mxu0
        %693 = vmatprep.mubr.f32.mxu0 0.0
        %694 = vmatmul.mubr.f32.gmra.mxu0 %v564
        %v695 = vpop.f32.mrf.mxu0
        %v696 = vadd.f32 %v533, %v695
        %v697 = vpop.f32.mrf.mxu0
        %698 = vmatprep.mubr.f32.mxu0 0.0
        %699 = vmatmul.mubr.f32.gmra.mxu0 %v567
        %v700 = vpop.f32.mrf.mxu0
        %v701 = vadd.f32 %v533, %v700
        %v702 = vpop.f32.mrf.mxu0
        %703 = vmatprep.mubr.f32.mxu0 0.0
        %704 = vmatmul.mubr.f32.gmra.mxu0 %v570
        %v705 = vpop.f32.mrf.mxu0
        %v706 = vadd.f32 %v533, %v705
        %v707 = vpop.f32.mrf.mxu0
        %708 = vmatprep.mubr.f32.mxu0 0.0
        %709 = vmatmul.mubr.f32.gmra.mxu0 %v573
        %v710 = vpop.f32.mrf.mxu0
        %v711 = vadd.f32 %v533, %v710
        %v712 = vpop.f32.mrf.mxu0
        %713 = vmatprep.mubr.f32.mxu0 0.0
        %714 = vmatmul.mubr.f32.gmra.mxu0 %v576
        %v715 = vpop.f32.mrf.mxu0
        %v716 = vadd.f32 %v533, %v715
        %v717 = vpop.f32.mrf.mxu0
        %718 = vmatprep.mubr.f32.mxu0 0.0
        %719 = vmatmul.mubr.f32.gmra.mxu0 %v579
        %v720 = vpop.f32.mrf.mxu0
        %v721 = vadd.f32 %v533, %v720
        %v722 = vpop.f32.mrf.mxu0
        %723 = vmatprep.mubr.f32.mxu0 0.0
        %724 = vmatmul.mubr.f32.gmra.mxu0 %v582
        %v725 = vpop.f32.mrf.mxu0
        %v726 = vadd.f32 %v533, %v725
        %v727 = vpop.f32.mrf.mxu0
        %728 = vdwg.mxu0
        %v729 = vmax.f32 %v651, 0.0
        %v730 = vmax.f32 %v656, 0.0
        %v731 = vmax.f32 %v661, 0.0
        %v732 = vmax.f32 %v666, 0.0
        %v733 = vmax.f32 %v671, 0.0
        %v734 = vmax.f32 %v676, 0.0
        %v735 = vmax.f32 %v681, 0.0
        %v736 = vmax.f32 %v686, 0.0
        %v737 = vmax.f32 %v691, 0.0
        %v738 = vmax.f32 %v696, 0.0
        %v739 = vmax.f32 %v701, 0.0
        %v740 = vmax.f32 %v706, 0.0
        %v741 = vmax.f32 %v711, 0.0
        %v742 = vmax.f32 %v716, 0.0
        %v743 = vmax.f32 %v721, 0.0
        %v744 = vmax.f32 %v726, 0.0
        %v745 = vld [vmem:[%s499] sm:$0xff]
        %v746 = vld [vmem:[%s499 + $0x8] sm:$0xff]
        %v747 = vld [vmem:[%s499 + $0x10] sm:$0xff]
        %v748 = vld [vmem:[%s499 + $0x18] sm:$0xff]
        %v749 = vunpack.c.0.s8 %v745
        %v750 = vunpack.c.1.s8 %v745
        %v751 = vunpack.c.2.s8 %v745
        %v752 = vunpack.c.3.s8 %v745
        %v753 = vunpack.c.0.s8 %v746
        %v754 = vunpack.c.1.s8 %v746
        %v755 = vunpack.c.2.s8 %v746
        %v756 = vunpack.c.3.s8 %v746
        %v757 = vunpack.c.0.s8 %v747
        %v758 = vunpack.c.1.s8 %v747
        %v759 = vunpack.c.2.s8 %v747
        %v760 = vunpack.c.3.s8 %v747
        %v761 = vunpack.c.0.s8 %v748
        %v762 = vunpack.c.1.s8 %v748
        %v763 = vunpack.c.2.s8 %v748
        %v764 = vunpack.c.3.s8 %v748
        %v765 = vcvt.s32.f32 %v749
        %v766 = vcvt.s32.f32 %v750
        %v767 = vcvt.s32.f32 %v751
        %v768 = vcvt.s32.f32 %v752
        %v769 = vcvt.s32.f32 %v753
        %v770 = vcvt.s32.f32 %v754
        %v771 = vcvt.s32.f32 %v755
        %v772 = vcvt.s32.f32 %v756
        %v773 = vcvt.s32.f32 %v757
        %v774 = vcvt.s32.f32 %v758
        %v775 = vcvt.s32.f32 %v759
        %v776 = vcvt.s32.f32 %v760
        %v777 = vcvt.s32.f32 %v761
        %v778 = vcvt.s32.f32 %v762
        %v779 = vcvt.s32.f32 %v763
        %v780 = vcvt.s32.f32 %v764
        %v781 = vmul.f32 %v765, 1.25
        %v782 = vmul.f32 %v766, 1.25
        %v783 = vmul.f32 %v767, 1.25
        %v784 = vmul.f32 %v768, 1.25
        %v785 = vmul.f32 %v769, 1.25
        %v786 = vmul.f32 %v770, 1.25
        %v787 = vmul.f32 %v771, 1.25
        %v788 = vmul.f32 %v772, 1.25
        %v789 = vmul.f32 %v773, 1.25
        %v790 = vmul.f32 %v774, 1.25
        %v791 = vmul.f32 %v775, 1.25
        %v792 = vmul.f32 %v776, 1.25
        %v793 = vmul.f32 %v777, 1.25
        %v794 = vmul.f32 %v778, 1.25
        %v795 = vmul.f32 %v779, 1.25
        %v796 = vmul.f32 %v780, 1.25
        %v797 = vmul.f32 %v729, %v781
        %v798 = vmul.f32 %v730, %v782
        %v799 = vmul.f32 %v731, %v783
        %v800 = vmul.f32 %v732, %v784
        %v801 = vmul.f32 %v733, %v785
        %v802 = vmul.f32 %v734, %v786
        %v803 = vmul.f32 %v735, %v787
        %v804 = vmul.f32 %v736, %v788
        %v805 = vmul.f32 %v737, %v789
        %v806 = vmul.f32 %v738, %v790
        %v807 = vmul.f32 %v739, %v791
        %v808 = vmul.f32 %v740, %v792
        %v809 = vmul.f32 %v741, %v793
        %v810 = vmul.f32 %v742, %v794
        %v811 = vmul.f32 %v743, %v795
        %v812 = vmul.f32 %v744, %v796
        %v813 = vld [vmem:[%s3] sm:$0xff]
        %v814 = vld [vmem:[%s3 + $0x8] sm:$0xff]
        %v815 = vld [vmem:[%s3 + $0x10] sm:$0xff]
        %v816 = vld [vmem:[%s3 + $0x18] sm:$0xff]
        %v817 = vld [vmem:[%s3 + $0x20] sm:$0xff]
        %v818 = vld [vmem:[%s3 + $0x28] sm:$0xff]
        %v819 = vld [vmem:[%s3 + $0x30] sm:$0xff]
        %v820 = vld [vmem:[%s3 + $0x38] sm:$0xff]
        %v821 = vld [vmem:[%s3 + $0x40] sm:$0xff]
        %v822 = vld [vmem:[%s3 + $0x48] sm:$0xff]
        %v823 = vld [vmem:[%s3 + $0x50] sm:$0xff]
        %v824 = vld [vmem:[%s3 + $0x58] sm:$0xff]
        %v825 = vld [vmem:[%s3 + $0x60] sm:$0xff]
        %v826 = vld [vmem:[%s3 + $0x68] sm:$0xff]
        %v827 = vld [vmem:[%s3 + $0x70] sm:$0xff]
        %v828 = vld [vmem:[%s3 + $0x78] sm:$0xff]
        %v829 = vld [vmem:[%s4] sm:$0x1]
        %v831 = vlaneseq
        %v832 = vshrl.u32 %v831, 7
        %v833 = vsub.s32 0, %v832
        %v834 = vrot.slane %v829, %v833
        %836 = vmatprep.subr.mxu0 0.0
        %837 = vmatpush1.msra.mxu0 %v828
        %838 = vmatprep.subr.mxu0 0.0
        %839 = vmatpush1.msra.mxu0 %v827
        %840 = vmatprep.subr.mxu0 0.0
        %841 = vmatpush1.msra.mxu0 %v826
        %842 = vmatprep.subr.mxu0 0.0
        %843 = vmatpush1.msra.mxu0 %v825
        %844 = vmatprep.subr.mxu0 0.0
        %845 = vmatpush1.msra.mxu0 %v824
        %846 = vmatprep.subr.mxu0 0.0
        %847 = vmatpush1.msra.mxu0 %v823
        %848 = vmatprep.subr.mxu0 0.0
        %849 = vmatpush1.msra.mxu0 %v822
        %850 = vmatprep.subr.mxu0 0.0
        %851 = vmatpush1.msra.mxu0 %v821
        %852 = vmatprep.subr.mxu0 0.0
        %853 = vmatpush1.msra.mxu0 %v820
        %854 = vmatprep.subr.mxu0 0.0
        %855 = vmatpush1.msra.mxu0 %v819
        %856 = vmatprep.subr.mxu0 0.0
        %857 = vmatpush1.msra.mxu0 %v818
        %858 = vmatprep.subr.mxu0 0.0
        %859 = vmatpush1.msra.mxu0 %v817
        %860 = vmatprep.subr.mxu0 0.0
        %861 = vmatpush1.msra.mxu0 %v816
        %862 = vmatprep.subr.mxu0 0.0
        %863 = vmatpush1.msra.mxu0 %v815
        %864 = vmatprep.subr.mxu0 0.0
        %865 = vmatpush1.msra.mxu0 %v814
        %866 = vmatprep.subr.mxu0 0.0
        %867 = vmatpush1.msra.mxu0 %v813
        %868 = vmatprep.subr.mxu0 0.0
        %869 = vmatpush2.msra.mxu0 0.0
        %870 = vmatprep.subr.mxu0 0.0
        %871 = vmatpush2.msra.mxu0 0.0
        %872 = vmatprep.subr.mxu0 0.0
        %873 = vmatpush2.msra.mxu0 0.0
        %874 = vmatprep.subr.mxu0 0.0
        %875 = vmatpush2.msra.mxu0 0.0
        %876 = vmatprep.subr.mxu0 0.0
        %877 = vmatpush2.msra.mxu0 0.0
        %878 = vmatprep.subr.mxu0 0.0
        %879 = vmatpush2.msra.mxu0 0.0
        %880 = vmatprep.subr.mxu0 0.0
        %881 = vmatpush2.msra.mxu0 0.0
        %882 = vmatprep.subr.mxu0 0.0
        %883 = vmatpush2.msra.mxu0 0.0
        %884 = vmatprep.subr.mxu0 0.0
        %885 = vmatpush2.msra.mxu0 0.0
        %886 = vmatprep.subr.mxu0 0.0
        %887 = vmatpush2.msra.mxu0 0.0
        %888 = vmatprep.subr.mxu0 0.0
        %889 = vmatpush2.msra.mxu0 0.0
        %890 = vmatprep.subr.mxu0 0.0
        %891 = vmatpush2.msra.mxu0 0.0
        %892 = vmatprep.subr.mxu0 0.0
        %893 = vmatpush2.msra.mxu0 0.0
        %894 = vmatprep.subr.mxu0 0.0
        %895 = vmatpush2.msra.mxu0 0.0
        %896 = vmatprep.subr.mxu0 0.0
        %897 = vmatpush2.msra.mxu0 0.0
        %898 = vmatprep.subr.mxu0 0.0
        %899 = vmatpush2.msra.mxu0 0.0
        %900 = vmatprep.mubr.f32.mxu0 0.0
        %901 = vmatmul.mubr.f32.gmra.mxu0 %v797
        %v902 = vpop.f32.mrf.mxu0
        %v903 = vadd.f32 %v834, %v902
        %v904 = vpop.f32.mrf.mxu0
        %905 = vmatprep.mubr.f32.mxu0 0.0
        %906 = vmatmul.mubr.f32.gmra.mxu0 %v798
        %v907 = vpop.f32.mrf.mxu0
        %v908 = vadd.f32 %v834, %v907
        %v909 = vpop.f32.mrf.mxu0
        %910 = vmatprep.mubr.f32.mxu0 0.0
        %911 = vmatmul.mubr.f32.gmra.mxu0 %v799
        %v912 = vpop.f32.mrf.mxu0
        %v913 = vadd.f32 %v834, %v912
        %v914 = vpop.f32.mrf.mxu0
        %915 = vmatprep.mubr.f32.mxu0 0.0
        %916 = vmatmul.mubr.f32.gmra.mxu0 %v800
        %v917 = vpop.f32.mrf.mxu0
        %v918 = vadd.f32 %v834, %v917
        %v919 = vpop.f32.mrf.mxu0
        %920 = vmatprep.mubr.f32.mxu0 0.0
        %921 = vmatmul.mubr.f32.gmra.mxu0 %v801
        %v922 = vpop.f32.mrf.mxu0
        %v923 = vadd.f32 %v834, %v922
        %v924 = vpop.f32.mrf.mxu0
        %925 = vmatprep.mubr.f32.mxu0 0.0
        %926 = vmatmul.mubr.f32.gmra.mxu0 %v802
        %v927 = vpop.f32.mrf.mxu0
        %v928 = vadd.f32 %v834, %v927
        %v929 = vpop.f32.mrf.mxu0
        %930 = vmatprep.mubr.f32.mxu0 0.0
        %931 = vmatmul.mubr.f32.gmra.mxu0 %v803
        %v932 = vpop.f32.mrf.mxu0
        %v933 = vadd.f32 %v834, %v932
        %v934 = vpop.f32.mrf.mxu0
        %935 = vmatprep.mubr.f32.mxu0 0.0
        %936 = vmatmul.mubr.f32.gmra.mxu0 %v804
        %v937 = vpop.f32.mrf.mxu0
        %v938 = vadd.f32 %v834, %v937
        %v939 = vpop.f32.mrf.mxu0
        %940 = vmatprep.mubr.f32.mxu0 0.0
        %941 = vmatmul.mubr.f32.gmra.mxu0 %v805
        %v942 = vpop.f32.mrf.mxu0
        %v943 = vadd.f32 %v834, %v942
        %v944 = vpop.f32.mrf.mxu0
        %945 = vmatprep.mubr.f32.mxu0 0.0
        %946 = vmatmul.mubr.f32.gmra.mxu0 %v806
        %v947 = vpop.f32.mrf.mxu0
        %v948 = vadd.f32 %v834, %v947
        %v949 = vpop.f32.mrf.mxu0
        %950 = vmatprep.mubr.f32.mxu0 0.0
        %951 = vmatmul.mubr.f32.gmra.mxu0 %v807
        %v952 = vpop.f32.mrf.mxu0
        %v953 = vadd.f32 %v834, %v952
        %v954 = vpop.f32.mrf.mxu0
        %955 = vmatprep.mubr.f32.mxu0 0.0
        %956 = vmatmul.mubr.f32.gmra.mxu0 %v808
        %v957 = vpop.f32.mrf.mxu0
        %v958 = vadd.f32 %v834, %v957
        %v959 = vpop.f32.mrf.mxu0
        %960 = vmatprep.mubr.f32.mxu0 0.0
        %961 = vmatmul.mubr.f32.gmra.mxu0 %v809
        %v962 = vpop.f32.mrf.mxu0
        %v963 = vadd.f32 %v834, %v962
        %v964 = vpop.f32.mrf.mxu0
        %965 = vmatprep.mubr.f32.mxu0 0.0
        %966 = vmatmul.mubr.f32.gmra.mxu0 %v810
        %v967 = vpop.f32.mrf.mxu0
        %v968 = vadd.f32 %v834, %v967
        %v969 = vpop.f32.mrf.mxu0
        %970 = vmatprep.mubr.f32.mxu0 0.0
        %971 = vmatmul.mubr.f32.gmra.mxu0 %v811
        %v972 = vpop.f32.mrf.mxu0
        %v973 = vadd.f32 %v834, %v972
        %v974 = vpop.f32.mrf.mxu0
        %975 = vmatprep.mubr.f32.mxu0 0.0
        %976 = vmatmul.mubr.f32.gmra.mxu0 %v812
        %v977 = vpop.f32.mrf.mxu0
        %v978 = vadd.f32 %v834, %v977
        %v979 = vpop.f32.mrf.mxu0
        %980 = vdwg.mxu0
        %v981 = vmul.f32 %v903, 0.5
        %v982 = vmul.f32 %v908, 0.5
        %v983 = vmul.f32 %v913, 0.5
        %v984 = vmul.f32 %v918, 0.5
        %v985 = vmul.f32 %v923, 0.5
        %v986 = vmul.f32 %v928, 0.5
        %v987 = vmul.f32 %v933, 0.5
        %v988 = vmul.f32 %v938, 0.5
        %v989 = vmul.f32 %v943, 0.5
        %v990 = vmul.f32 %v948, 0.5
        %v991 = vmul.f32 %v953, 0.5
        %v992 = vmul.f32 %v958, 0.5
        %v993 = vmul.f32 %v963, 0.5
        %v994 = vmul.f32 %v968, 0.5
        %v995 = vmul.f32 %v973, 0.5
        %v996 = vmul.f32 %v978, 0.5
        %v997 = vmul.f32 %v981, 1.442695
        %v998 = vpow.pop %v997
        %v999 = vmul.f32 %v982, 1.442695
        %v1000 = vpow.pop %v999
        %v1001 = vmul.f32 %v983, 1.442695
        %v1002 = vpow.pop %v1001
        %v1003 = vmul.f32 %v984, 1.442695
        %v1004 = vpow.pop %v1003
        %v1005 = vmul.f32 %v985, 1.442695
        %v1006 = vpow.pop %v1005
        %v1007 = vmul.f32 %v986, 1.442695
        %v1008 = vpow.pop %v1007
        %v1009 = vmul.f32 %v987, 1.442695
        %v1010 = vpow.pop %v1009
        %v1011 = vmul.f32 %v988, 1.442695
        %v1012 = vpow.pop %v1011
        %v1013 = vmul.f32 %v989, 1.442695
        %v1014 = vpow.pop %v1013
        %v1015 = vmul.f32 %v990, 1.442695
        %v1016 = vpow.pop %v1015
        %v1017 = vmul.f32 %v991, 1.442695
        %v1018 = vpow.pop %v1017
        %v1019 = vmul.f32 %v992, 1.442695
        %v1020 = vpow.pop %v1019
        %v1021 = vmul.f32 %v993, 1.442695
        %v1022 = vpow.pop %v1021
        %v1023 = vmul.f32 %v994, 1.442695
        %v1024 = vpow.pop %v1023
        %v1025 = vmul.f32 %v995, 1.442695
        %v1026 = vpow.pop %v1025
        %v1027 = vmul.f32 %v996, 1.442695
        %v1028 = vpow.pop %v1027
        %v1029 = vld [vmem:[%s493] sm:$0xff]
        %v1030 = vld [vmem:[%s493 + $0x8] sm:$0xff]
        %v1031 = vld [vmem:[%s493 + $0x10] sm:$0xff]
        %v1032 = vld [vmem:[%s493 + $0x18] sm:$0xff]
        %v1033 = vld [vmem:[%s493 + $0x20] sm:$0xff]
        %v1034 = vld [vmem:[%s493 + $0x28] sm:$0xff]
        %v1035 = vld [vmem:[%s493 + $0x30] sm:$0xff]
        %v1036 = vld [vmem:[%s493 + $0x38] sm:$0xff]
        %v1037 = vld [vmem:[%s493 + $0x40] sm:$0xff]
        %v1038 = vld [vmem:[%s493 + $0x48] sm:$0xff]
        %v1039 = vld [vmem:[%s493 + $0x50] sm:$0xff]
        %v1040 = vld [vmem:[%s493 + $0x58] sm:$0xff]
        %v1041 = vld [vmem:[%s493 + $0x60] sm:$0xff]
        %v1042 = vld [vmem:[%s493 + $0x68] sm:$0xff]
        %v1043 = vld [vmem:[%s493 + $0x70] sm:$0xff]
        %v1044 = vld [vmem:[%s493 + $0x78] sm:$0xff]
        %v1045 = vmul.f32 %v1029, %v998
        %v1046 = vmul.f32 %v1030, %v1000
        %v1047 = vmul.f32 %v1031, %v1002
        %v1048 = vmul.f32 %v1032, %v1004
        %v1049 = vmul.f32 %v1033, %v1006
        %v1050 = vmul.f32 %v1034, %v1008
        %v1051 = vmul.f32 %v1035, %v1010
        %v1052 = vmul.f32 %v1036, %v1012
        %v1053 = vmul.f32 %v1037, %v1014
        %v1054 = vmul.f32 %v1038, %v1016
        %v1055 = vmul.f32 %v1039, %v1018
        %v1056 = vmul.f32 %v1040, %v1020
        %v1057 = vmul.f32 %v1041, %v1022
        %v1058 = vmul.f32 %v1042, %v1024
        %v1059 = vmul.f32 %v1043, %v1026
        %v1060 = vmul.f32 %v1044, %v1028
        %v1061 = vld [vmem:[%s5] sm:$0xff]
        %v1062 = vld [vmem:[%s5 + $0x8] sm:$0xff]
        %v1063 = vld [vmem:[%s5 + $0x10] sm:$0xff]
        %v1064 = vld [vmem:[%s5 + $0x18] sm:$0xff]
        %v1065 = vld [vmem:[%s5 + $0x20] sm:$0xff]
        %v1066 = vld [vmem:[%s5 + $0x28] sm:$0xff]
        %v1067 = vld [vmem:[%s5 + $0x30] sm:$0xff]
        %v1068 = vld [vmem:[%s5 + $0x38] sm:$0xff]
        %v1069 = vld [vmem:[%s5 + $0x40] sm:$0xff]
        %v1070 = vld [vmem:[%s5 + $0x48] sm:$0xff]
        %v1071 = vld [vmem:[%s5 + $0x50] sm:$0xff]
        %v1072 = vld [vmem:[%s5 + $0x58] sm:$0xff]
        %v1073 = vld [vmem:[%s5 + $0x60] sm:$0xff]
        %v1074 = vld [vmem:[%s5 + $0x68] sm:$0xff]
        %v1075 = vld [vmem:[%s5 + $0x70] sm:$0xff]
        %v1076 = vld [vmem:[%s5 + $0x78] sm:$0xff]
        %v1077 = vld [vmem:[%s6] sm:$0xff]
        %v1078 = vld [vmem:[%s6 + $0x8] sm:$0xff]
        %v1079 = vld [vmem:[%s6 + $0x10] sm:$0xf]
        %vm1080 = vcmask 162816
        %v1082 = vsel %vm1080, %v1045, 0
        %v1085 = vsel %vm1080, %v1046, 0
        %v1088 = vsel %vm1080, %v1047, 0
        %v1091 = vsel %vm1080, %v1048, 0
        %v1094 = vsel %vm1080, %v1049, 0
        %v1097 = vsel %vm1080, %v1050, 0
        %v1100 = vsel %vm1080, %v1051, 0
        %v1103 = vsel %vm1080, %v1052, 0
        %v1106 = vsel %vm1080, %v1053, 0
        %v1109 = vsel %vm1080, %v1054, 0
        %v1112 = vsel %vm1080, %v1055, 0
        %v1115 = vsel %vm1080, %v1056, 0
        %v1118 = vsel %vm1080, %v1057, 0
        %v1121 = vsel %vm1080, %v1058, 0
        %v1124 = vsel %vm1080, %v1059, 0
        %v1127 = vsel %vm1080, %v1060, 0
        %vm1129 = vcmask 1043456
        %v1131 = vsel %vm1129, %v1079, 0
        %1133 = vmatprep.subr.mxu0 0.0
        %1134 = vmatpush1.msra.mxu0 0.0
        %1135 = vmatprep.subr.mxu0 0.0
        %1136 = vmatpush1.msra.mxu0 0.0
        %1137 = vmatprep.subr.mxu0 0.0
        %1138 = vmatpush1.msra.mxu0 0.0
        %1139 = vmatprep.subr.mxu0 0.0
        %1140 = vmatpush1.msra.mxu0 0.0
        %1141 = vmatprep.subr.mxu0 0.0
        %1142 = vmatpush1.msra.mxu0 0.0
        %1143 = vmatprep.subr.mxu0 0.0
        %1144 = vmatpush1.msra.mxu0 0.0
        %1145 = vmatprep.subr.mxu0 0.0
        %1146 = vmatpush1.msra.mxu0 0.0
        %1147 = vmatprep.subr.mxu0 0.0
        %1148 = vmatpush1.msra.mxu0 0.0
        %1149 = vmatprep.subr.mxu0 0.0
        %1150 = vmatpush1.msra.mxu0 0.0
        %1151 = vmatprep.subr.mxu0 0.0
        %1152 = vmatpush1.msra.mxu0 0.0
        %1153 = vmatprep.subr.mxu0 0.0
        %1154 = vmatpush1.msra.mxu0 0.0
        %1155 = vmatprep.subr.mxu0 0.0
        %1156 = vmatpush1.msra.mxu0 0.0
        %1157 = vmatprep.subr.mxu0 0.0
        %1158 = vmatpush1.msra.mxu0 0.0
        %1159 = vmatprep.subr.mxu0 0.0
        %1160 = vmatpush1.msra.mxu0 %v1131
        %1161 = vmatprep.subr.mxu0 0.0
        %1162 = vmatpush1.msra.mxu0 %v1078
        %1163 = vmatprep.subr.mxu0 0.0
        %1164 = vmatpush1.msra.mxu0 %v1077
        %1165 = vmatprep.subr.mxu0 0.0
        %1166 = vmatpush2.msra.mxu0 0.0
        %1167 = vmatprep.subr.mxu0 0.0
        %1168 = vmatpush2.msra.mxu0 0.0
        %1169 = vmatprep.subr.mxu0 0.0
        %1170 = vmatpush2.msra.mxu0 0.0
        %1171 = vmatprep.subr.mxu0 0.0
        %1172 = vmatpush2.msra.mxu0 0.0
        %1173 = vmatprep.subr.mxu0 0.0
        %1174 = vmatpush2.msra.mxu0 0.0
        %1175 = vmatprep.subr.mxu0 0.0
        %1176 = vmatpush2.msra.mxu0 0.0
        %1177 = vmatprep.subr.mxu0 0.0
        %1178 = vmatpush2.msra.mxu0 0.0
        %1179 = vmatprep.subr.mxu0 0.0
        %1180 = vmatpush2.msra.mxu0 0.0
        %1181 = vmatprep.subr.mxu0 0.0
        %1182 = vmatpush2.msra.mxu0 0.0
        %1183 = vmatprep.subr.mxu0 0.0
        %1184 = vmatpush2.msra.mxu0 0.0
        %1185 = vmatprep.subr.mxu0 0.0
        %1186 = vmatpush2.msra.mxu0 0.0
        %1187 = vmatprep.subr.mxu0 0.0
        %1188 = vmatpush2.msra.mxu0 0.0
        %1189 = vmatprep.subr.mxu0 0.0
        %1190 = vmatpush2.msra.mxu0 0.0
        %1191 = vmatprep.subr.mxu0 0.0
        %1192 = vmatpush2.msra.mxu0 0.0
        %1193 = vmatprep.subr.mxu0 0.0
        %1194 = vmatpush2.msra.mxu0 0.0
        %1195 = vmatprep.subr.mxu0 0.0
        %1196 = vmatpush2.msra.mxu0 0.0
        %1197 = vmatprep.mubr.f32.mxu0 0.0
        %1198 = vmatmul.mubr.f32.gmra.mxu0 %v1082
        %v1199 = vpop.f32.mrf.mxu0
        %v1200 = vadd.f32 0.0, %v1199
        %v1201 = vpop.f32.mrf.mxu0
        %1202 = vmatprep.mubr.f32.mxu0 0.0
        %1203 = vmatmul.mubr.f32.gmra.mxu0 %v1085
        %v1204 = vpop.f32.mrf.mxu0
        %v1205 = vadd.f32 0.0, %v1204
        %v1206 = vpop.f32.mrf.mxu0
        %1207 = vmatprep.mubr.f32.mxu0 0.0
        %1208 = vmatmul.mubr.f32.gmra.mxu0 %v1088
        %v1209 = vpop.f32.mrf.mxu0
        %v1210 = vadd.f32 0.0, %v1209
        %v1211 = vpop.f32.mrf.mxu0
        %1212 = vmatprep.mubr.f32.mxu0 0.0
        %1213 = vmatmul.mubr.f32.gmra.mxu0 %v1091
        %v1214 = vpop.f32.mrf.mxu0
        %v1215 = vadd.f32 0.0, %v1214
        %v1216 = vpop.f32.mrf.mxu0
        %1217 = vmatprep.mubr.f32.mxu0 0.0
        %1218 = vmatmul.mubr.f32.gmra.mxu0 %v1094
        %v1219 = vpop.f32.mrf.mxu0
        %v1220 = vadd.f32 0.0, %v1219
        %v1221 = vpop.f32.mrf.mxu0
        %1222 = vmatprep.mubr.f32.mxu0 0.0
        %1223 = vmatmul.mubr.f32.gmra.mxu0 %v1097
        %v1224 = vpop.f32.mrf.mxu0
        %v1225 = vadd.f32 0.0, %v1224
        %v1226 = vpop.f32.mrf.mxu0
        %1227 = vmatprep.mubr.f32.mxu0 0.0
        %1228 = vmatmul.mubr.f32.gmra.mxu0 %v1100
        %v1229 = vpop.f32.mrf.mxu0
        %v1230 = vadd.f32 0.0, %v1229
        %v1231 = vpop.f32.mrf.mxu0
        %1232 = vmatprep.mubr.f32.mxu0 0.0
        %1233 = vmatmul.mubr.f32.gmra.mxu0 %v1103
        %v1234 = vpop.f32.mrf.mxu0
        %v1235 = vadd.f32 0.0, %v1234
        %v1236 = vpop.f32.mrf.mxu0
        %1237 = vmatprep.mubr.f32.mxu0 0.0
        %1238 = vmatmul.mubr.f32.gmra.mxu0 %v1106
        %v1239 = vpop.f32.mrf.mxu0
        %v1240 = vadd.f32 0.0, %v1239
        %v1241 = vpop.f32.mrf.mxu0
        %1242 = vmatprep.mubr.f32.mxu0 0.0
        %1243 = vmatmul.mubr.f32.gmra.mxu0 %v1109
        %v1244 = vpop.f32.mrf.mxu0
        %v1245 = vadd.f32 0.0, %v1244
        %v1246 = vpop.f32.mrf.mxu0
        %1247 = vmatprep.mubr.f32.mxu0 0.0
        %1248 = vmatmul.mubr.f32.gmra.mxu0 %v1112
        %v1249 = vpop.f32.mrf.mxu0
        %v1250 = vadd.f32 0.0, %v1249
        %v1251 = vpop.f32.mrf.mxu0
        %1252 = vmatprep.mubr.f32.mxu0 0.0
        %1253 = vmatmul.mubr.f32.gmra.mxu0 %v1115
        %v1254 = vpop.f32.mrf.mxu0
        %v1255 = vadd.f32 0.0, %v1254
        %v1256 = vpop.f32.mrf.mxu0
        %1257 = vmatprep.mubr.f32.mxu0 0.0
        %1258 = vmatmul.mubr.f32.gmra.mxu0 %v1118
        %v1259 = vpop.f32.mrf.mxu0
        %v1260 = vadd.f32 0.0, %v1259
        %v1261 = vpop.f32.mrf.mxu0
        %1262 = vmatprep.mubr.f32.mxu0 0.0
        %1263 = vmatmul.mubr.f32.gmra.mxu0 %v1121
        %v1264 = vpop.f32.mrf.mxu0
        %v1265 = vadd.f32 0.0, %v1264
        %v1266 = vpop.f32.mrf.mxu0
        %1267 = vmatprep.mubr.f32.mxu0 0.0
        %1268 = vmatmul.mubr.f32.gmra.mxu0 %v1124
        %v1269 = vpop.f32.mrf.mxu0
        %v1270 = vadd.f32 0.0, %v1269
        %v1271 = vpop.f32.mrf.mxu0
        %1272 = vmatprep.mubr.f32.mxu0 0.0
        %1273 = vmatmul.mubr.f32.gmra.mxu0 %v1127
        %v1274 = vpop.f32.mrf.mxu0
        %v1275 = vadd.f32 0.0, %v1274
        %v1276 = vpop.f32.mrf.mxu0
        %1277 = vdwg.mxu0
        %1278 = vmatprep.subr.mxu0 0.0
        %1279 = vmatpush1.msra.mxu0 %v1076
        %1280 = vmatprep.subr.mxu0 0.0
        %1281 = vmatpush1.msra.mxu0 %v1075
        %1282 = vmatprep.subr.mxu0 0.0
        %1283 = vmatpush1.msra.mxu0 %v1074
        %1284 = vmatprep.subr.mxu0 0.0
        %1285 = vmatpush1.msra.mxu0 %v1073
        %1286 = vmatprep.subr.mxu0 0.0
        %1287 = vmatpush1.msra.mxu0 %v1072
        %1288 = vmatprep.subr.mxu0 0.0
        %1289 = vmatpush1.msra.mxu0 %v1071
        %1290 = vmatprep.subr.mxu0 0.0
        %1291 = vmatpush1.msra.mxu0 %v1070
        %1292 = vmatprep.subr.mxu0 0.0
        %1293 = vmatpush1.msra.mxu0 %v1069
        %1294 = vmatprep.subr.mxu0 0.0
        %1295 = vmatpush1.msra.mxu0 %v1068
        %1296 = vmatprep.subr.mxu0 0.0
        %1297 = vmatpush1.msra.mxu0 %v1067
        %1298 = vmatprep.subr.mxu0 0.0
        %1299 = vmatpush1.msra.mxu0 %v1066
        %1300 = vmatprep.subr.mxu0 0.0
        %1301 = vmatpush1.msra.mxu0 %v1065
        %1302 = vmatprep.subr.mxu0 0.0
        %1303 = vmatpush1.msra.mxu0 %v1064
        %1304 = vmatprep.subr.mxu0 0.0
        %1305 = vmatpush1.msra.mxu0 %v1063
        %1306 = vmatprep.subr.mxu0 0.0
        %1307 = vmatpush1.msra.mxu0 %v1062
        %1308 = vmatprep.subr.mxu0 0.0
        %1309 = vmatpush1.msra.mxu0 %v1061
        %1310 = vmatprep.subr.mxu0 0.0
        %1311 = vmatpush2.msra.mxu0 0.0
        %1312 = vmatprep.subr.mxu0 0.0
        %1313 = vmatpush2.msra.mxu0 0.0
        %1314 = vmatprep.subr.mxu0 0.0
        %1315 = vmatpush2.msra.mxu0 0.0
        %1316 = vmatprep.subr.mxu0 0.0
        %1317 = vmatpush2.msra.mxu0 0.0
        %1318 = vmatprep.subr.mxu0 0.0
        %1319 = vmatpush2.msra.mxu0 0.0
        %1320 = vmatprep.subr.mxu0 0.0
        %1321 = vmatpush2.msra.mxu0 0.0
        %1322 = vmatprep.subr.mxu0 0.0
        %1323 = vmatpush2.msra.mxu0 0.0
        %1324 = vmatprep.subr.mxu0 0.0
        %1325 = vmatpush2.msra.mxu0 0.0
        %1326 = vmatprep.subr.mxu0 0.0
        %1327 = vmatpush2.msra.mxu0 0.0
        %1328 = vmatprep.subr.mxu0 0.0
        %1329 = vmatpush2.msra.mxu0 0.0
        %1330 = vmatprep.subr.mxu0 0.0
        %1331 = vmatpush2.msra.mxu0 0.0
        %1332 = vmatprep.subr.mxu0 0.0
        %1333 = vmatpush2.msra.mxu0 0.0
        %1334 = vmatprep.subr.mxu0 0.0
        %1335 = vmatpush2.msra.mxu0 0.0
        %1336 = vmatprep.subr.mxu0 0.0
        %1337 = vmatpush2.msra.mxu0 0.0
        %1338 = vmatprep.subr.mxu0 0.0
        %1339 = vmatpush2.msra.mxu0 0.0
        %1340 = vmatprep.subr.mxu0 0.0
        %1341 = vmatpush2.msra.mxu0 0.0
        %1342 = vmatprep.mubr.f32.mxu0 0.0
        %1343 = vmatmul.mubr.f32.gmra.mxu0 %v903
        %v1344 = vpop.f32.mrf.mxu0
        %v1345 = vadd.f32 %v1200, %v1344
        %v1346 = vpop.f32.mrf.mxu0
        %1347 = vmatprep.mubr.f32.mxu0 0.0
        %1348 = vmatmul.mubr.f32.gmra.mxu0 %v908
        %v1349 = vpop.f32.mrf.mxu0
        %v1350 = vadd.f32 %v1205, %v1349
        %v1351 = vpop.f32.mrf.mxu0
        %1352 = vmatprep.mubr.f32.mxu0 0.0
        %1353 = vmatmul.mubr.f32.gmra.mxu0 %v913
        %v1354 = vpop.f32.mrf.mxu0
        %v1355 = vadd.f32 %v1210, %v1354
        %v1356 = vpop.f32.mrf.mxu0
        %1357 = vmatprep.mubr.f32.mxu0 0.0
        %1358 = vmatmul.mubr.f32.gmra.mxu0 %v918
        %v1359 = vpop.f32.mrf.mxu0
        %v1360 = vadd.f32 %v1215, %v1359
        %v1361 = vpop.f32.mrf.mxu0
        %1362 = vmatprep.mubr.f32.mxu0 0.0
        %1363 = vmatmul.mubr.f32.gmra.mxu0 %v923
        %v1364 = vpop.f32.mrf.mxu0
        %v1365 = vadd.f32 %v1220, %v1364
        %v1366 = vpop.f32.mrf.mxu0
        %1367 = vmatprep.mubr.f32.mxu0 0.0
        %1368 = vmatmul.mubr.f32.gmra.mxu0 %v928
        %v1369 = vpop.f32.mrf.mxu0
        %v1370 = vadd.f32 %v1225, %v1369
        %v1371 = vpop.f32.mrf.mxu0
        %1372 = vmatprep.mubr.f32.mxu0 0.0
        %1373 = vmatmul.mubr.f32.gmra.mxu0 %v933
        %v1374 = vpop.f32.mrf.mxu0
        %v1375 = vadd.f32 %v1230, %v1374
        %v1376 = vpop.f32.mrf.mxu0
        %1377 = vmatprep.mubr.f32.mxu0 0.0
        %1378 = vmatmul.mubr.f32.gmra.mxu0 %v938
        %v1379 = vpop.f32.mrf.mxu0
        %v1380 = vadd.f32 %v1235, %v1379
        %v1381 = vpop.f32.mrf.mxu0
        %1382 = vmatprep.mubr.f32.mxu0 0.0
        %1383 = vmatmul.mubr.f32.gmra.mxu0 %v943
        %v1384 = vpop.f32.mrf.mxu0
        %v1385 = vadd.f32 %v1240, %v1384
        %v1386 = vpop.f32.mrf.mxu0
        %1387 = vmatprep.mubr.f32.mxu0 0.0
        %1388 = vmatmul.mubr.f32.gmra.mxu0 %v948
        %v1389 = vpop.f32.mrf.mxu0
        %v1390 = vadd.f32 %v1245, %v1389
        %v1391 = vpop.f32.mrf.mxu0
        %1392 = vmatprep.mubr.f32.mxu0 0.0
        %1393 = vmatmul.mubr.f32.gmra.mxu0 %v953
        %v1394 = vpop.f32.mrf.mxu0
        %v1395 = vadd.f32 %v1250, %v1394
        %v1396 = vpop.f32.mrf.mxu0
        %1397 = vmatprep.mubr.f32.mxu0 0.0
        %1398 = vmatmul.mubr.f32.gmra.mxu0 %v958
        %v1399 = vpop.f32.mrf.mxu0
        %v1400 = vadd.f32 %v1255, %v1399
        %v1401 = vpop.f32.mrf.mxu0
        %1402 = vmatprep.mubr.f32.mxu0 0.0
        %1403 = vmatmul.mubr.f32.gmra.mxu0 %v963
        %v1404 = vpop.f32.mrf.mxu0
        %v1405 = vadd.f32 %v1260, %v1404
        %v1406 = vpop.f32.mrf.mxu0
        %1407 = vmatprep.mubr.f32.mxu0 0.0
        %1408 = vmatmul.mubr.f32.gmra.mxu0 %v968
        %v1409 = vpop.f32.mrf.mxu0
        %v1410 = vadd.f32 %v1265, %v1409
        %v1411 = vpop.f32.mrf.mxu0
        %1412 = vmatprep.mubr.f32.mxu0 0.0
        %1413 = vmatmul.mubr.f32.gmra.mxu0 %v973
        %v1414 = vpop.f32.mrf.mxu0
        %v1415 = vadd.f32 %v1270, %v1414
        %v1416 = vpop.f32.mrf.mxu0
        %1417 = vmatprep.mubr.f32.mxu0 0.0
        %1418 = vmatmul.mubr.f32.gmra.mxu0 %v978
        %v1419 = vpop.f32.mrf.mxu0
        %v1420 = vadd.f32 %v1275, %v1419
        %v1421 = vpop.f32.mrf.mxu0
        %1422 = vdwg.mxu0
        %v1423 = vld [vmem:[%s7] sm:$0x1]
        %v1425 = vlaneseq
        %v1426 = vshrl.u32 %v1425, 7
        %v1427 = vsub.s32 0, %v1426
        %v1428 = vrot.slane %v1423, %v1427
        %v1430 = vadd.f32 %v1345, %v1428
        %v1431 = vadd.f32 %v1350, %v1428
        %v1432 = vadd.f32 %v1355, %v1428
        %v1433 = vadd.f32 %v1360, %v1428
        %v1434 = vadd.f32 %v1365, %v1428
        %v1435 = vadd.f32 %v1370, %v1428
        %v1436 = vadd.f32 %v1375, %v1428
        %v1437 = vadd.f32 %v1380, %v1428
        %v1438 = vadd.f32 %v1385, %v1428
        %v1439 = vadd.f32 %v1390, %v1428
        %v1440 = vadd.f32 %v1395, %v1428
        %v1441 = vadd.f32 %v1400, %v1428
        %v1442 = vadd.f32 %v1405, %v1428
        %v1443 = vadd.f32 %v1410, %v1428
        %v1444 = vadd.f32 %v1415, %v1428
        %v1445 = vadd.f32 %v1420, %v1428
        %v1446 = vmax.f32 %v1430, 0.0
        %v1447 = vmax.f32 %v1431, 0.0
        %v1448 = vmax.f32 %v1432, 0.0
        %v1449 = vmax.f32 %v1433, 0.0
        %v1450 = vmax.f32 %v1434, 0.0
        %v1451 = vmax.f32 %v1435, 0.0
        %v1452 = vmax.f32 %v1436, 0.0
        %v1453 = vmax.f32 %v1437, 0.0
        %v1454 = vmax.f32 %v1438, 0.0
        %v1455 = vmax.f32 %v1439, 0.0
        %v1456 = vmax.f32 %v1440, 0.0
        %v1457 = vmax.f32 %v1441, 0.0
        %v1458 = vmax.f32 %v1442, 0.0
        %v1459 = vmax.f32 %v1443, 0.0
        %v1460 = vmax.f32 %v1444, 0.0
        %v1461 = vmax.f32 %v1445, 0.0
        %v1462 = vld [vmem:[%s505] sm:$0xff]
        %v1463 = vld [vmem:[%s505 + $0x8] sm:$0xff]
        %v1464 = vld [vmem:[%s505 + $0x10] sm:$0xff]
        %v1465 = vld [vmem:[%s505 + $0x18] sm:$0xff]
        %v1466 = vunpack.c.0.s8 %v1462
        %v1467 = vunpack.c.1.s8 %v1462
        %v1468 = vunpack.c.2.s8 %v1462
        %v1469 = vunpack.c.3.s8 %v1462
        %v1470 = vunpack.c.0.s8 %v1463
        %v1471 = vunpack.c.1.s8 %v1463
        %v1472 = vunpack.c.2.s8 %v1463
        %v1473 = vunpack.c.3.s8 %v1463
        %v1474 = vunpack.c.0.s8 %v1464
        %v1475 = vunpack.c.1.s8 %v1464
        %v1476 = vunpack.c.2.s8 %v1464
        %v1477 = vunpack.c.3.s8 %v1464
        %v1478 = vunpack.c.0.s8 %v1465
        %v1479 = vunpack.c.1.s8 %v1465
        %v1480 = vunpack.c.2.s8 %v1465
        %v1481 = vunpack.c.3.s8 %v1465
        %v1482 = vcvt.s32.f32 %v1466
        %v1483 = vcvt.s32.f32 %v1467
        %v1484 = vcvt.s32.f32 %v1468
        %v1485 = vcvt.s32.f32 %v1469
        %v1486 = vcvt.s32.f32 %v1470
        %v1487 = vcvt.s32.f32 %v1471
        %v1488 = vcvt.s32.f32 %v1472
        %v1489 = vcvt.s32.f32 %v1473
        %v1490 = vcvt.s32.f32 %v1474
        %v1491 = vcvt.s32.f32 %v1475
        %v1492 = vcvt.s32.f32 %v1476
        %v1493 = vcvt.s32.f32 %v1477
        %v1494 = vcvt.s32.f32 %v1478
        %v1495 = vcvt.s32.f32 %v1479
        %v1496 = vcvt.s32.f32 %v1480
        %v1497 = vcvt.s32.f32 %v1481
        %v1498 = vmul.f32 %v1482, 1.25
        %v1499 = vmul.f32 %v1483, 1.25
        %v1500 = vmul.f32 %v1484, 1.25
        %v1501 = vmul.f32 %v1485, 1.25
        %v1502 = vmul.f32 %v1486, 1.25
        %v1503 = vmul.f32 %v1487, 1.25
        %v1504 = vmul.f32 %v1488, 1.25
        %v1505 = vmul.f32 %v1489, 1.25
        %v1506 = vmul.f32 %v1490, 1.25
        %v1507 = vmul.f32 %v1491, 1.25
        %v1508 = vmul.f32 %v1492, 1.25
        %v1509 = vmul.f32 %v1493, 1.25
        %v1510 = vmul.f32 %v1494, 1.25
        %v1511 = vmul.f32 %v1495, 1.25
        %v1512 = vmul.f32 %v1496, 1.25
        %v1513 = vmul.f32 %v1497, 1.25
        %v1514 = vmul.f32 %v1446, %v1498
        %v1515 = vmul.f32 %v1447, %v1499
        %v1516 = vmul.f32 %v1448, %v1500
        %v1517 = vmul.f32 %v1449, %v1501
        %v1518 = vmul.f32 %v1450, %v1502
        %v1519 = vmul.f32 %v1451, %v1503
        %v1520 = vmul.f32 %v1452, %v1504
        %v1521 = vmul.f32 %v1453, %v1505
        %v1522 = vmul.f32 %v1454, %v1506
        %v1523 = vmul.f32 %v1455, %v1507
        %v1524 = vmul.f32 %v1456, %v1508
        %v1525 = vmul.f32 %v1457, %v1509
        %v1526 = vmul.f32 %v1458, %v1510
        %v1527 = vmul.f32 %v1459, %v1511
        %v1528 = vmul.f32 %v1460, %v1512
        %v1529 = vmul.f32 %v1461, %v1513
        %v1530 = vld [vmem:[%s8] sm:$0xff]
        %v1531 = vld [vmem:[%s8 + $0x8] sm:$0xff]
        %v1532 = vld [vmem:[%s8 + $0x10] sm:$0xff]
        %v1533 = vld [vmem:[%s8 + $0x18] sm:$0xff]
        %v1534 = vld [vmem:[%s8 + $0x20] sm:$0xff]
        %v1535 = vld [vmem:[%s8 + $0x28] sm:$0xff]
        %v1536 = vld [vmem:[%s8 + $0x30] sm:$0xff]
        %v1537 = vld [vmem:[%s8 + $0x38] sm:$0xff]
        %v1538 = vld [vmem:[%s8 + $0x40] sm:$0xff]
        %v1539 = vld [vmem:[%s8 + $0x48] sm:$0xff]
        %v1540 = vld [vmem:[%s8 + $0x50] sm:$0xff]
        %v1541 = vld [vmem:[%s8 + $0x58] sm:$0xff]
        %v1542 = vld [vmem:[%s8 + $0x60] sm:$0xff]
        %v1543 = vld [vmem:[%s8 + $0x68] sm:$0xff]
        %v1544 = vld [vmem:[%s8 + $0x70] sm:$0xff]
        %v1545 = vld [vmem:[%s8 + $0x78] sm:$0xff]
        %v1546 = vld [vmem:[%s9] sm:$0x1]
        %v1548 = vlaneseq
        %v1549 = vshrl.u32 %v1548, 7
        %v1550 = vsub.s32 0, %v1549
        %v1551 = vrot.slane %v1546, %v1550
        %1553 = vmatprep.subr.mxu0 0.0
        %1554 = vmatpush1.msra.mxu0 %v1545
        %1555 = vmatprep.subr.mxu0 0.0
        %1556 = vmatpush1.msra.mxu0 %v1544
        %1557 = vmatprep.subr.mxu0 0.0
        %1558 = vmatpush1.msra.mxu0 %v1543
        %1559 = vmatprep.subr.mxu0 0.0
        %1560 = vmatpush1.msra.mxu0 %v1542
        %1561 = vmatprep.subr.mxu0 0.0
        %1562 = vmatpush1.msra.mxu0 %v1541
        %1563 = vmatprep.subr.mxu0 0.0
        %1564 = vmatpush1.msra.mxu0 %v1540
        %1565 = vmatprep.subr.mxu0 0.0
        %1566 = vmatpush1.msra.mxu0 %v1539
        %1567 = vmatprep.subr.mxu0 0.0
        %1568 = vmatpush1.msra.mxu0 %v1538
        %1569 = vmatprep.subr.mxu0 0.0
        %1570 = vmatpush1.msra.mxu0 %v1537
        %1571 = vmatprep.subr.mxu0 0.0
        %1572 = vmatpush1.msra.mxu0 %v1536
        %1573 = vmatprep.subr.mxu0 0.0
        %1574 = vmatpush1.msra.mxu0 %v1535
        %1575 = vmatprep.subr.mxu0 0.0
        %1576 = vmatpush1.msra.mxu0 %v1534
        %1577 = vmatprep.subr.mxu0 0.0
        %1578 = vmatpush1.msra.mxu0 %v1533
        %1579 = vmatprep.subr.mxu0 0.0
        %1580 = vmatpush1.msra.mxu0 %v1532
        %1581 = vmatprep.subr.mxu0 0.0
        %1582 = vmatpush1.msra.mxu0 %v1531
        %1583 = vmatprep.subr.mxu0 0.0
        %1584 = vmatpush1.msra.mxu0 %v1530
        %1585 = vmatprep.subr.mxu0 0.0
        %1586 = vmatpush2.msra.mxu0 0.0
        %1587 = vmatprep.subr.mxu0 0.0
        %1588 = vmatpush2.msra.mxu0 0.0
        %1589 = vmatprep.subr.mxu0 0.0
        %1590 = vmatpush2.msra.mxu0 0.0
        %1591 = vmatprep.subr.mxu0 0.0
        %1592 = vmatpush2.msra.mxu0 0.0
        %1593 = vmatprep.subr.mxu0 0.0
        %1594 = vmatpush2.msra.mxu0 0.0
        %1595 = vmatprep.subr.mxu0 0.0
        %1596 = vmatpush2.msra.mxu0 0.0
        %1597 = vmatprep.subr.mxu0 0.0
        %1598 = vmatpush2.msra.mxu0 0.0
        %1599 = vmatprep.subr.mxu0 0.0
        %1600 = vmatpush2.msra.mxu0 0.0
        %1601 = vmatprep.subr.mxu0 0.0
        %1602 = vmatpush2.msra.mxu0 0.0
        %1603 = vmatprep.subr.mxu0 0.0
        %1604 = vmatpush2.msra.mxu0 0.0
        %1605 = vmatprep.subr.mxu0 0.0
        %1606 = vmatpush2.msra.mxu0 0.0
        %1607 = vmatprep.subr.mxu0 0.0
        %1608 = vmatpush2.msra.mxu0 0.0
        %1609 = vmatprep.subr.mxu0 0.0
        %1610 = vmatpush2.msra.mxu0 0.0
        %1611 = vmatprep.subr.mxu0 0.0
        %1612 = vmatpush2.msra.mxu0 0.0
        %1613 = vmatprep.subr.mxu0 0.0
        %1614 = vmatpush2.msra.mxu0 0.0
        %1615 = vmatprep.subr.mxu0 0.0
        %1616 = vmatpush2.msra.mxu0 0.0
        %1617 = vmatprep.mubr.f32.mxu0 0.0
        %1618 = vmatmul.mubr.f32.gmra.mxu0 %v1514
        %v1619 = vpop.f32.mrf.mxu0
        %v1620 = vadd.f32 %v1551, %v1619
        %v1621 = vpop.f32.mrf.mxu0
        %1622 = vmatprep.mubr.f32.mxu0 0.0
        %1623 = vmatmul.mubr.f32.gmra.mxu0 %v1515
        %v1624 = vpop.f32.mrf.mxu0
        %v1625 = vadd.f32 %v1551, %v1624
        %v1626 = vpop.f32.mrf.mxu0
        %1627 = vmatprep.mubr.f32.mxu0 0.0
        %1628 = vmatmul.mubr.f32.gmra.mxu0 %v1516
        %v1629 = vpop.f32.mrf.mxu0
        %v1630 = vadd.f32 %v1551, %v1629
        %v1631 = vpop.f32.mrf.mxu0
        %1632 = vmatprep.mubr.f32.mxu0 0.0
        %1633 = vmatmul.mubr.f32.gmra.mxu0 %v1517
        %v1634 = vpop.f32.mrf.mxu0
        %v1635 = vadd.f32 %v1551, %v1634
        %v1636 = vpop.f32.mrf.mxu0
        %1637 = vmatprep.mubr.f32.mxu0 0.0
        %1638 = vmatmul.mubr.f32.gmra.mxu0 %v1518
        %v1639 = vpop.f32.mrf.mxu0
        %v1640 = vadd.f32 %v1551, %v1639
        %v1641 = vpop.f32.mrf.mxu0
        %1642 = vmatprep.mubr.f32.mxu0 0.0
        %1643 = vmatmul.mubr.f32.gmra.mxu0 %v1519
        %v1644 = vpop.f32.mrf.mxu0
        %v1645 = vadd.f32 %v1551, %v1644
        %v1646 = vpop.f32.mrf.mxu0
        %1647 = vmatprep.mubr.f32.mxu0 0.0
        %1648 = vmatmul.mubr.f32.gmra.mxu0 %v1520
        %v1649 = vpop.f32.mrf.mxu0
        %v1650 = vadd.f32 %v1551, %v1649
        %v1651 = vpop.f32.mrf.mxu0
        %1652 = vmatprep.mubr.f32.mxu0 0.0
        %1653 = vmatmul.mubr.f32.gmra.mxu0 %v1521
        %v1654 = vpop.f32.mrf.mxu0
        %v1655 = vadd.f32 %v1551, %v1654
        %v1656 = vpop.f32.mrf.mxu0
        %1657 = vmatprep.mubr.f32.mxu0 0.0
        %1658 = vmatmul.mubr.f32.gmra.mxu0 %v1522
        %v1659 = vpop.f32.mrf.mxu0
        %v1660 = vadd.f32 %v1551, %v1659
        %v1661 = vpop.f32.mrf.mxu0
        %1662 = vmatprep.mubr.f32.mxu0 0.0
        %1663 = vmatmul.mubr.f32.gmra.mxu0 %v1523
        %v1664 = vpop.f32.mrf.mxu0
        %v1665 = vadd.f32 %v1551, %v1664
        %v1666 = vpop.f32.mrf.mxu0
        %1667 = vmatprep.mubr.f32.mxu0 0.0
        %1668 = vmatmul.mubr.f32.gmra.mxu0 %v1524
        %v1669 = vpop.f32.mrf.mxu0
        %v1670 = vadd.f32 %v1551, %v1669
        %v1671 = vpop.f32.mrf.mxu0
        %1672 = vmatprep.mubr.f32.mxu0 0.0
        %1673 = vmatmul.mubr.f32.gmra.mxu0 %v1525
        %v1674 = vpop.f32.mrf.mxu0
        %v1675 = vadd.f32 %v1551, %v1674
        %v1676 = vpop.f32.mrf.mxu0
        %1677 = vmatprep.mubr.f32.mxu0 0.0
        %1678 = vmatmul.mubr.f32.gmra.mxu0 %v1526
        %v1679 = vpop.f32.mrf.mxu0
        %v1680 = vadd.f32 %v1551, %v1679
        %v1681 = vpop.f32.mrf.mxu0
        %1682 = vmatprep.mubr.f32.mxu0 0.0
        %1683 = vmatmul.mubr.f32.gmra.mxu0 %v1527
        %v1684 = vpop.f32.mrf.mxu0
        %v1685 = vadd.f32 %v1551, %v1684
        %v1686 = vpop.f32.mrf.mxu0
        %1687 = vmatprep.mubr.f32.mxu0 0.0
        %1688 = vmatmul.mubr.f32.gmra.mxu0 %v1528
        %v1689 = vpop.f32.mrf.mxu0
        %v1690 = vadd.f32 %v1551, %v1689
        %v1691 = vpop.f32.mrf.mxu0
        %1692 = vmatprep.mubr.f32.mxu0 0.0
        %1693 = vmatmul.mubr.f32.gmra.mxu0 %v1529
        %v1694 = vpop.f32.mrf.mxu0
        %v1695 = vadd.f32 %v1551, %v1694
        %v1696 = vpop.f32.mrf.mxu0
        %1697 = vdwg.mxu0
        %v1698 = vmul.f32 %v1620, 0.5
        %v1699 = vmul.f32 %v1625, 0.5
        %v1700 = vmul.f32 %v1630, 0.5
        %v1701 = vmul.f32 %v1635, 0.5
        %v1702 = vmul.f32 %v1640, 0.5
        %v1703 = vmul.f32 %v1645, 0.5
        %v1704 = vmul.f32 %v1650, 0.5
        %v1705 = vmul.f32 %v1655, 0.5
        %v1706 = vmul.f32 %v1660, 0.5
        %v1707 = vmul.f32 %v1665, 0.5
        %v1708 = vmul.f32 %v1670, 0.5
        %v1709 = vmul.f32 %v1675, 0.5
        %v1710 = vmul.f32 %v1680, 0.5
        %v1711 = vmul.f32 %v1685, 0.5
        %v1712 = vmul.f32 %v1690, 0.5
        %v1713 = vmul.f32 %v1695, 0.5
        %v1714 = vtanh.pop %v1698
        %v1715 = vtanh.pop %v1699
        %v1716 = vtanh.pop %v1700
        %v1717 = vtanh.pop %v1701
        %v1718 = vtanh.pop %v1702
        %v1719 = vtanh.pop %v1703
        %v1720 = vtanh.pop %v1704
        %v1721 = vtanh.pop %v1705
        %v1722 = vtanh.pop %v1706
        %v1723 = vtanh.pop %v1707
        %v1724 = vtanh.pop %v1708
        %v1725 = vtanh.pop %v1709
        %v1726 = vtanh.pop %v1710
        %v1727 = vtanh.pop %v1711
        %v1728 = vtanh.pop %v1712
        %v1729 = vtanh.pop %v1713
        %v1730 = vadd.f32 %v1714, 1.0
        %v1731 = vadd.f32 %v1715, 1.0
        %v1732 = vadd.f32 %v1716, 1.0
        %v1733 = vadd.f32 %v1717, 1.0
        %v1734 = vadd.f32 %v1718, 1.0
        %v1735 = vadd.f32 %v1719, 1.0
        %v1736 = vadd.f32 %v1720, 1.0
        %v1737 = vadd.f32 %v1721, 1.0
        %v1738 = vadd.f32 %v1722, 1.0
        %v1739 = vadd.f32 %v1723, 1.0
        %v1740 = vadd.f32 %v1724, 1.0
        %v1741 = vadd.f32 %v1725, 1.0
        %v1742 = vadd.f32 %v1726, 1.0
        %v1743 = vadd.f32 %v1727, 1.0
        %v1744 = vadd.f32 %v1728, 1.0
        %v1745 = vadd.f32 %v1729, 1.0
        %v1746 = vmul.f32 %v1730, 0.5
        %v1747 = vmul.f32 %v1731, 0.5
        %v1748 = vmul.f32 %v1732, 0.5
        %v1749 = vmul.f32 %v1733, 0.5
        %v1750 = vmul.f32 %v1734, 0.5
        %v1751 = vmul.f32 %v1735, 0.5
        %v1752 = vmul.f32 %v1736, 0.5
        %v1753 = vmul.f32 %v1737, 0.5
        %v1754 = vmul.f32 %v1738, 0.5
        %v1755 = vmul.f32 %v1739, 0.5
        %v1756 = vmul.f32 %v1740, 0.5
        %v1757 = vmul.f32 %v1741, 0.5
        %v1758 = vmul.f32 %v1742, 0.5
        %v1759 = vmul.f32 %v1743, 0.5
        %v1760 = vmul.f32 %v1744, 0.5
        %v1761 = vmul.f32 %v1745, 0.5
        %v1762 = vlaneseq
        %v1763 = vand.u32 %v1762, 127
        %vm1764 = vcmp.lt.s32.totalorder %v1763, 40
        %v1765 = vsel %vm1764, %v903, %v1746
        %v1766 = vsel %vm1764, %v908, %v1747
        %v1767 = vsel %vm1764, %v913, %v1748
        %v1768 = vsel %vm1764, %v918, %v1749
        %v1769 = vsel %vm1764, %v923, %v1750
        %v1770 = vsel %vm1764, %v928, %v1751
        %v1771 = vsel %vm1764, %v933, %v1752
        %v1772 = vsel %vm1764, %v938, %v1753
        %v1773 = vsel %vm1764, %v943, %v1754
        %v1774 = vsel %vm1764, %v948, %v1755
        %v1775 = vsel %vm1764, %v953, %v1756
        %v1776 = vsel %vm1764, %v958, %v1757
        %v1777 = vsel %vm1764, %v963, %v1758
        %v1778 = vsel %vm1764, %v968, %v1759
        %v1779 = vsel %vm1764, %v973, %v1760
        %v1780 = vsel %vm1764, %v978, %v1761
        %1781 = vst [vmem:[%s482] sm:$0xff] %v1765
        %1782 = vst [vmem:[%s482 + $0x8] sm:$0xff] %v1766
        %1783 = vst [vmem:[%s482 + $0x10] sm:$0xff] %v1767
        %1784 = vst [vmem:[%s482 + $0x18] sm:$0xff] %v1768
        %1785 = vst [vmem:[%s482 + $0x20] sm:$0xff] %v1769
        %1786 = vst [vmem:[%s482 + $0x28] sm:$0xff] %v1770
        %1787 = vst [vmem:[%s482 + $0x30] sm:$0xff] %v1771
        %1788 = vst [vmem:[%s482 + $0x38] sm:$0xff] %v1772
        %1789 = vst [vmem:[%s482 + $0x40] sm:$0xff] %v1773
        %1790 = vst [vmem:[%s482 + $0x48] sm:$0xff] %v1774
        %1791 = vst [vmem:[%s482 + $0x50] sm:$0xff] %v1775
        %1792 = vst [vmem:[%s482 + $0x58] sm:$0xff] %v1776
        %1793 = vst [vmem:[%s482 + $0x60] sm:$0xff] %v1777
        %1794 = vst [vmem:[%s482 + $0x68] sm:$0xff] %v1778
        %1795 = vst [vmem:[%s482 + $0x70] sm:$0xff] %v1779
        %1796 = vst [vmem:[%s482 + $0x78] sm:$0xff] %v1780
        %s1797 = sand.u32 %s328, 1
        %s1798 = scalar_lea.sflag [#allocation3], %s1797
        %s1799 = sand.u32 %s328, 1
        %s1800 = smul.addr %s1799, 128
        %s1801 = scalar_lea.vmem [#allocation2], %s1800
        // Predicated region
        $region73: #{tpu_custom_call.1} parent=71 // pred_check
          %p1802 = pneg %p338
        $region74: #{tpu_custom_call.1} parent=71 // pred_check_branch
          %1804 = sbr.rel (%p1802) target = $region76
        $region75: #{tpu_custom_call.1} parent=71 // pred_region
          %s1805 = smul.u32 16, %s27
          %s1807 = ssub.s32 2048, 2048
          %1808 = vsyncadd %s1798, %s1807
          %s1809 = smul.addr %s1805, 128
          %s1810 = scalar_lea.hbm %s13, %s1809
          %s1811 = sshll.u32 %s1801, 4
          %s1812 = int_to_ptr.vmem [resolvable:$true] %s1811
          %1817 = dma.vmem_to_hbm [thread:$0]  %s1812, 2048, %s1810, %s1798, 128, 128, 8
        $region76: #{tpu_custom_call.1} parent=71 // pred_fallthru
          _
      $region72: #{tpu_custom_call.1} parent=5 // pred_fallthru
        _
      %p1818 = scmp.le.s32.totalorder 2, %s22
      // Predicated region
      $region77: #{tpu_custom_call.1} parent=5 // pred_check
        %p1819 = pneg %p1818
      $region78: #{tpu_custom_call.1} parent=5 // pred_check_branch
        %1821 = sbr.rel (%p1819) target = $region80
      $region79: #{tpu_custom_call.1} parent=5 // pred_region
        %s1822 = ssub.s32 %s22, 2
        // Predicated region
        $region81: #{tpu_custom_call.1} parent=79 // pred_check
          %p1823 = pneg %p344
        $region82: #{tpu_custom_call.1} parent=79 // pred_check_branch
          %1825 = sbr.rel (%p1823) target = $region84
        $region83: #{tpu_custom_call.1} parent=79 // pred_region
          %s1826 = sand.u32 %s329, 1
          %s1827 = scalar_lea.sflag [#allocation3], %s1826
          %s1828 = sand.u32 %s329, 1
          %s1829 = smul.addr %s1828, 128
          %s1830 = scalar_lea.vmem [#allocation2], %s1829
          %1831 = dma.done %s1827, 2048
        $region84: #{tpu_custom_call.1} parent=79 // pred_fallthru
          _
      $region80: #{tpu_custom_call.1} parent=5 // pred_fallthru
        _
    $region6: #{tpu_custom_call.1} parent=1 // loop_footer
      %s26 = sadd.s32 1, %s22
    $region7: #{tpu_custom_call.1} parent=1 // loop_footer_branch
      %21 = sbr.rel target = $region3
    $region8: #{tpu_custom_call.1} parent=1 // loop_exit
      _
    %1832 = vsyncpa [#allocation3], 1
    %s1833 = scalar_lea.sflag [#allocation3], 1
    %1834 = vsyncpa %s1833, 1

</llo_original>
